<compile_context>
chip_gen: v6e
topology: v6e:2x2x1
jax: 0.10.0
libtpu: 0.0.40
codegen_flags: <defaults>
</compile_context>

<pallas_src>
import functools

import jax
import jax.numpy as jnp
from jax.experimental import pallas as pl
from jax.experimental.pallas import tpu as pltpu

EPS = 1e-5


def _round_up(x, m):
    return (x + m - 1) // m * m


def _default_vmem_limit():
    # v7x: 64 MiB physical VMEM -> ~48 MiB limit; v5e/v6e: 128 MiB -> ~96 MiB.
    try:
        cap = int(pltpu.get_tpu_info().vmem_capacity_bytes)
    except Exception:
        cap = 64 * 1024 * 1024
    return max(32 * 1024 * 1024, min(cap * 3 // 4, 100 * 1024 * 1024))


_VMEM_LIMIT = _default_vmem_limit()


def _pick_m_tiling(m):
    """Choose (tm, Mp). Prefer a tile that divides M exactly (no M padding)."""
    for t in (1024, 512, 256, 128):
        if m >= t and m % t == 0:
            return t, m
    if m <= 1024:
        mp = _round_up(m, 8)
        return mp, mp                      # single M tile
    t = 512
    return t, _round_up(m, t)


# --------------------------------------------------------------------------
# Kernel 1: conv GEMM (bf16 x bf16 -> f32) + per-M-tile BN sum / sumsq.
# grid = (M tiles,), 'parallel'. Weight is VMEM-resident (constant index_map).
# stats block layout: row 0 = sum, row 1 = sum of squares, rows 2..7 zero
# (keeps the block (8, Cp)-aligned for lane/sublane-dense stores).
# --------------------------------------------------------------------------
def _conv_stats_kernel(lhs_ref, w_ref, conv_ref, stats_ref):
    conv = jnp.dot(lhs_ref[...], w_ref[...], preferred_element_type=jnp.float32)
    conv_ref[...] = conv.astype(conv_ref.dtype)          # bf16 writeback
    cp = conv.shape[1]
    ssum = jnp.sum(conv, axis=0, keepdims=True)          # (1, Cp) f32
    ssq = jnp.sum(conv * conv, axis=0, keepdims=True)    # (1, Cp) f32
    pad = jnp.zeros((6, cp), jnp.float32)
    stats_ref[...] = jnp.concatenate([ssum, ssq, pad], axis=0)[None]


# --------------------------------------------------------------------------
# Kernel 2: lane-dense BN affine + ReLU epilogue (f32 math, bf16 in/out).
# --------------------------------------------------------------------------
def _bn_relu_kernel(conv_ref, scale_ref, shift_ref, out_ref):
    y = conv_ref[...].astype(jnp.float32) * scale_ref[...] + shift_ref[...]
    out_ref[...] = jnp.maximum(y, 0.0).astype(out_ref.dtype)


def _fused_gemm_bn_relu(lhs, w2d, gamma, beta, m_real):
    """relu(batchnorm_train(lhs @ w2d)); lhs: (M, K) bf16, w2d: (K, C) -> (M, C) bf16."""
    M, K = lhs.shape
    C = w2d.shape[1]
    Cp = _round_up(C, 128)                 # lane-dense output columns
    tm, Mp = _pick_m_tiling(M)
    nmt = Mp // tm

    # Zero row padding is stats-neutral (padded rows contribute 0 to the
    # sums; we divide by the true M below). No K padding: full-K blocks.
    if Mp != M:
        lhs = jnp.pad(lhs, ((0, Mp - M), (0, 0)))
    w_p = w2d.astype(jnp.bfloat16)
    if Cp != C:
        w_p = jnp.pad(w_p, ((0, 0), (0, Cp - C)))

    conv, stats = pl.pallas_call(
        _conv_stats_kernel,
        out_shape=(jax.ShapeDtypeStruct((Mp, Cp), jnp.bfloat16),
                   jax.ShapeDtypeStruct((nmt, 8, Cp), jnp.float32)),
        grid=(nmt,),
        in_specs=[pl.BlockSpec((tm, K), lambda m: (m, 0)),
                  pl.BlockSpec((K, Cp), lambda m: (0, 0))],   # resident weight
        out_specs=(pl.BlockSpec((tm, Cp), lambda m: (m, 0)),
                   pl.BlockSpec((1, 8, Cp), lambda m: (m, 0, 0))),
        compiler_params=pltpu.CompilerParams(
            dimension_semantics=("parallel",),          # per-tile stats -> no race
            vmem_limit_bytes=_VMEM_LIMIT),
        cost_estimate=pl.CostEstimate(
            flops=2 * Mp * K * Cp,
            transcendentals=0,
            bytes_accessed=Mp * K * 2 + K * Cp * 2 + Mp * Cp * 2 + nmt * 8 * Cp * 4),
    )(lhs, w_p)

    # Tiny per-channel scalar math: reduce per-tile partials, fold mean /
    # rsqrt(var) / gamma / beta into a single scale & shift (all f32).
    inv_m = 1.0 / float(m_real)
    ssum = jnp.sum(stats[:, 0, :], axis=0)              # (Cp,)
    ssq = jnp.sum(stats[:, 1, :], axis=0)
    mean = ssum * inv_m
    # Biased variance (BN training). E[x^2]-E[x]^2 in f32 with clamp;
    # TODO(synk): compensated/centered accumulation if |mean| >> std matters.
    var = jnp.maximum(ssq * inv_m - mean * mean, 0.0)
    inv_std = jax.lax.rsqrt(var + EPS)
    gamma_p = jnp.pad(gamma.astype(jnp.float32), (0, Cp - C))
    beta_p = jnp.pad(beta.astype(jnp.float32), (0, Cp - C))
    scale_v = gamma_p * inv_std            # padded channels: gamma=0 -> output 0
    shift_v = beta_p - mean * scale_v
    scale = scale_v.reshape(1, Cp)
    shift = shift_v.reshape(1, Cp)

    tm2 = tm
    for t in (2048, 1024):
        if Mp % t == 0 and t > tm2:
            tm2 = t
            break

    out = pl.pallas_call(
        _bn_relu_kernel,
        out_shape=jax.ShapeDtypeStruct((Mp, Cp), jnp.bfloat16),
        grid=(Mp // tm2,),
        in_specs=[pl.BlockSpec((tm2, Cp), lambda m: (m, 0)),
                  pl.BlockSpec((1, Cp), lambda m: (0, 0)),
                  pl.BlockSpec((1, Cp), lambda m: (0, 0))],
        out_specs=pl.BlockSpec((tm2, Cp), lambda m: (m, 0)),
        compiler_params=pltpu.CompilerParams(
            dimension_semantics=("parallel",),
            vmem_limit_bytes=_VMEM_LIMIT),
        cost_estimate=pl.CostEstimate(
            flops=2 * Mp * Cp,
            transcendentals=0,
            bytes_accessed=2 * Mp * Cp * 2 + 2 * Cp * 4),
    )(conv, scale, shift)

    if Mp != M or Cp != C:
        out = out[:M, :C]
    return out


# --------------------------------------------------------------------------
# NHWC conv wrappers (channels-last, bf16 activations throughout the network).
# --------------------------------------------------------------------------
def _im2col_nhwc(x, kh, kw, stride, padding, dilation):
    n, h, w, c = x.shape
    xp = jnp.pad(x, ((0, 0), (padding, padding), (padding, padding), (0, 0)))
    oh = (h + 2 * padding - dilation * (kh - 1) - 1) // stride + 1
    ow = (w + 2 * padding - dilation * (kw - 1) - 1) // stride + 1
    taps = []
    for i in range(kh):
        for j in range(kw):
            r0, c0 = i * dilation, j * dilation
            taps.append(xp[:, r0:r0 + stride * (oh - 1) + 1:stride,
                           c0:c0 + stride * (ow - 1) + 1:stride, :])
    col = jnp.stack(taps, axis=3)                       # (N, OH, OW, kh*kw, C)
    return col.reshape(n * oh * ow, kh * kw * c), oh, ow


def bn_conv2d_nhwc(x, weight, gamma, beta, *, stride, padding, dilation=1):
    """x: (N,H,W,Cin); weight: (Cout,Cin,kh,kw) PyTorch OIHW.
    Returns (N,OH,OW,Cout) bf16 of relu(batchnorm_train(conv(x)))."""
    # TODO(synk): groups > 1 / conv bias not implemented (DenseNet uses
    # groups=1, bias=False everywhere).
    n, h, w, cin = x.shape
    cout, _, kh, kw = weight.shape
    if x.dtype != jnp.bfloat16:
        x = x.astype(jnp.bfloat16)          # cast once; stats stay f32 in-kernel
    if kh == 1 and kw == 1 and stride == 1 and padding == 0:
        # Implicit GEMM: 1x1 convs (most DenseNet layers) need no im2col.
        lhs = x.reshape(n * h * w, cin)
        oh, ow = h, w
        w2d = weight.reshape(cout, cin).T
    else:
        # TODO(synk): kxk convs still materialize a bf16 im2col; an implicit
        # tap-axis GEMM would cut the remaining kh*kw x LHS HBM traffic.
        lhs, oh, ow = _im2col_nhwc(x, kh, kw, stride, padding, dilation)
        w2d = weight.transpose(2, 3, 1, 0).reshape(kh * kw * cin, cout)
    out = _fused_gemm_bn_relu(lhs, w2d, gamma, beta, n * oh * ow)
    return out.reshape(n, oh, ow, cout)


def dense_block_nhwc(x, layer_params):
    """DenseBlock.forward, channels-last: each layer is
    BN_Conv2d(cin, 4k, 1,1,0) -> BN_Conv2d(4k, k, 3,1,1), concat on channels."""
    out = x.astype(jnp.bfloat16)
    # TODO(synk): replace the growing bf16 concat with an in-place channel-slab
    # write (input_output_aliases) to remove the O(L^2) copy traffic.
    for (w1, g1, b1, w2, g2, b2) in layer_params:
        feat = bn_conv2d_nhwc(out, w1, g1, b1, stride=1, padding=0)
        feat = bn_conv2d_nhwc(feat, w2, g2, b2, stride=1, padding=1)
        out = jnp.concatenate([out, feat], axis=-1)
    return out


# --------------------------------------------------------------------------
# NCHW boundary APIs matching the PyTorch modules (transpose/cast only at the
# external edge, once per network call).
# --------------------------------------------------------------------------
@functools.partial(jax.jit, static_argnames=("stride", "padding", "dilation"))
def bn_conv2d(x, weight, gamma, beta, *, stride, padding, dilation=1):
    y = bn_conv2d_nhwc(jnp.transpose(x, (0, 2, 3, 1)), weight, gamma, beta,
                       stride=stride, padding=padding, dilation=dilation)
    return jnp.transpose(y, (0, 3, 1, 2)).astype(jnp.float32)


@jax.jit
def dense_block(x, layer_params):
    y = dense_block_nhwc(jnp.transpose(x, (0, 2, 3, 1)), layer_params)
    return jnp.transpose(y, (0, 3, 1, 2)).astype(jnp.float32)


# TODO(synk): the full DenseNet stem maxpool / transition avg-pool / final fc
# are not ported: the reference forward calls nn.MaxPool2d / nn.AvgPool2d with
# tensors as constructor arguments (not runnable as written). BN_Conv2d and
# DenseBlock above cover the Pallas-relevant compute path.


# --------------------------------------------------------------------------
# Pure-JAX references.
# --------------------------------------------------------------------------
def _bn_conv_ref(x, weight, gamma, beta, stride, padding, dilation=1):
    conv = jax.lax.conv_general_dilated(
        x, weight, window_strides=(stride, stride),
        padding=[(padding, padding), (padding, padding)],
        rhs_dilation=(dilation, dilation),
        dimension_numbers=("NCHW", "OIHW", "NCHW"))
    mean = conv.mean(axis=(0, 2, 3), keepdims=True)
    var = conv.var(axis=(0, 2, 3), keepdims=True)       # biased, BN training mode
    y = (conv - mean) * jax.lax.rsqrt(var + EPS)
    y = y * gamma[None, :, None, None] + beta[None, :, None, None]
    return jnp.maximum(y, 0.0)


def _dense_block_ref(x, layer_params):
    out = x
    for (w1, g1, b1, w2, g2, b2) in layer_params:
        feat = _bn_conv_ref(out, w1, g1, b1, 1, 0)
        feat = _bn_conv_ref(feat, w2, g2, b2, 1, 1)
        out = jnp.concatenate([out, feat], axis=1)
    return out


if __name__ == "__main__":
    key = jax.random.PRNGKey(0)
    TOL = 7e-2      # bf16 inputs / MXU / bf16 intermediates tolerance vs f32 ref

    # --- single BN_Conv2d (3x3, stride 1, pad 1): DenseNet growth conv -----
    N, Cin, H, W, Cout = 2, 4, 16, 16, 8
    k1, k2, k3, k4, key = jax.random.split(key, 5)
    x = jax.random.normal(k1, (N, Cin, H, W), dtype=jnp.float32)
    w = 0.1 * jax.random.normal(k2, (Cout, Cin, 3, 3), dtype=jnp.float32)
    g = 1.0 + 0.1 * jax.random.normal(k3, (Cout,), dtype=jnp.float32)
    b = 0.1 * jax.random.normal(k4, (Cout,), dtype=jnp.float32)
    out = jax.block_until_ready(bn_conv2d(x, w, g, b, stride=1, padding=1))
    ref = _bn_conv_ref(x, w, g, b, 1, 1)
    assert out.shape == ref.shape, (out.shape, ref.shape)
    err = float(jnp.max(jnp.abs(out - ref)))
    assert err < TOL, err

    # --- stem-style BN_Conv2d (7x7, stride 2, pad 3) ------------------------
    k1, k2, k3, k4, key = jax.random.split(key, 5)
    xs = jax.random.normal(k1, (N, 3, 16, 16), dtype=jnp.float32)
    ws = 0.1 * jax.random.normal(k2, (Cout, 3, 7, 7), dtype=jnp.float32)
    gs = 1.0 + 0.1 * jax.random.normal(k3, (Cout,), dtype=jnp.float32)
    bs = 0.1 * jax.random.normal(k4, (Cout,), dtype=jnp.float32)
    out_s = jax.block_until_ready(bn_conv2d(xs, ws, gs, bs, stride=2, padding=3))
    ref_s = _bn_conv_ref(xs, ws, gs, bs, 2, 3)
    assert out_s.shape == ref_s.shape, (out_s.shape, ref_s.shape)
    err_s = float(jnp.max(jnp.abs(out_s - ref_s)))
    assert err_s < TOL, err_s

    # --- small DenseBlock: 4 input channels, 2 layers, growth rate 4 --------
    growth, num_layers, c0, Hs = 4, 2, 4, 8
    k1, key = jax.random.split(key)
    xd = jax.random.normal(k1, (N, c0, Hs, Hs), dtype=jnp.float32)
    params = []
    cin = c0
    for _ in range(num_layers):
        ks = jax.random.split(key, 7)
        key = ks[0]
        w1 = 0.1 * jax.random.normal(ks[1], (4 * growth, cin, 1, 1), dtype=jnp.float32)
        g1 = 1.0 + 0.1 * jax.random.normal(ks[2], (4 * growth,), dtype=jnp.float32)
        b1 = 0.1 * jax.random.normal(ks[3], (4 * growth,), dtype=jnp.float32)
        w2 = 0.1 * jax.random.normal(ks[4], (growth, 4 * growth, 3, 3), dtype=jnp.float32)
        g2 = 1.0 + 0.1 * jax.random.normal(ks[5], (growth,), dtype=jnp.float32)
        b2 = 0.1 * jax.random.normal(ks[6], (growth,), dtype=jnp.float32)
        params.append((w1, g1, b1, w2, g2, b2))
        cin += growth
    out_d = jax.block_until_ready(dense_block(xd, params))
    ref_d = _dense_block_ref(xd, params)
    assert out_d.shape == ref_d.shape, (out_d.shape, ref_d.shape)
    err_d = float(jnp.max(jnp.abs(out_d - ref_d)))
    assert err_d < TOL, err_d

    print("KERNEL_OK")
</pallas_src>

<mosaic_0001>
module attributes {stable_mosaic.version = 11 : i64} {
  func.func @_conv_stats_kernel(%arg0: i32, %arg1: memref<512x36xbf16, #tpu.memory_space<vmem>>, %arg2: memref<36x128xbf16, #tpu.memory_space<vmem>>, %arg3: memref<512x128xbf16, #tpu.memory_space<vmem>>, %arg4: memref<1x8x128xf32, #tpu.memory_space<vmem>>) attributes {dimension_semantics = [#tpu.dimension_semantics<parallel>], iteration_bounds = array<i64: 1>, scalar_prefetch = 0 : i64, scratch_operands = 0 : i64, tpu.core_type = #tpu.core_type<tc>, window_params = [{transform_indices = @transform_0, window_bounds = array<i64: 512, 36>}, {pipeline_mode = #tpu.pipeline_mode<synchronous>, transform_indices = @transform_1, window_bounds = array<i64: 36, 128>}, {transform_indices = @transform_2, window_bounds = array<i64: 512, 128>}, {transform_indices = @transform_3, window_bounds = array<i64: 1, 8, 128>}]} {
    %c0 = arith.constant 0 : index
    %c0_0 = arith.constant 0 : index
    %0 = vector.load %arg1[%c0, %c0_0] : memref<512x36xbf16, #tpu.memory_space<vmem>>, vector<512x36xbf16>
    %c0_1 = arith.constant 0 : index
    %c0_2 = arith.constant 0 : index
    %1 = vector.load %arg2[%c0_1, %c0_2] : memref<36x128xbf16, #tpu.memory_space<vmem>>, vector<36x128xbf16>
    %cst = arith.constant dense<0.000000e+00> : vector<512x128xf32>
    %2 = tpu.matmul %0, %1, %cst {dimension_numbers = #tpu.dot_dimension_numbers<[1], [0], [0], [1], [0, 0, 1, 1], [], []>} : vector<512x36xbf16>, vector<36x128xbf16>, vector<512x128xf32> -> vector<512x128xf32>
    %3 = arith.truncf %2 : vector<512x128xf32> to vector<512x128xbf16>
    %c0_3 = arith.constant 0 : index
    %c0_4 = arith.constant 0 : index
    %4 = vector.load %arg3[%c0_3, %c0_4] : memref<512x128xbf16, #tpu.memory_space<vmem>>, vector<512x128xbf16>
    tpu.vector_store %arg3[%c0_3, %c0_4], %3 {strides = array<i32>} : memref<512x128xbf16, #tpu.memory_space<vmem>>, vector<512x128xbf16>,
    %cst_5 = arith.constant dense<0.000000e+00> : vector<128xf32>
    %5 = vector.multi_reduction <add>, %2, %cst_5 [0] : vector<512x128xf32> to vector<128xf32>
    %6 = vector.shape_cast %5 : vector<128xf32> to vector<1x128xf32>
    %7 = arith.mulf %2, %2 : vector<512x128xf32>
    %cst_6 = arith.constant dense<0.000000e+00> : vector<128xf32>
    %8 = vector.multi_reduction <add>, %7, %cst_6 [0] : vector<512x128xf32> to vector<128xf32>
    %9 = vector.shape_cast %8 : vector<128xf32> to vector<1x128xf32>
    %cst_7 = arith.constant 0.000000e+00 : f32
    %10 = vector.broadcast %cst_7 : f32 to vector<6x128xf32>
    %11 = tpu.concatenate %6, %9, %10 in 0 : vector<1x128xf32>, vector<1x128xf32>, vector<6x128xf32> -> vector<8x128xf32>
    %12 = vector.shape_cast %11 : vector<8x128xf32> to vector<1x8x128xf32>
    %c0_8 = arith.constant 0 : index
    %c0_9 = arith.constant 0 : index
    %c0_10 = arith.constant 0 : index
    %13 = vector.load %arg4[%c0_8, %c0_9, %c0_10] : memref<1x8x128xf32, #tpu.memory_space<vmem>>, vector<1x8x128xf32>
    tpu.vector_store %arg4[%c0_8, %c0_9, %c0_10], %12 {strides = array<i32>} : memref<1x8x128xf32, #tpu.memory_space<vmem>>, vector<1x8x128xf32>,
    return
  }
  func.func @transform_0(%arg0: i32) -> (i32, i32) {
    %c0_i32 = arith.constant 0 : i32
    %c0_i32_0 = arith.constant 0 : i32
    return %arg0, %c0_i32 : i32, i32
  }
  func.func @transform_1(%arg0: i32) -> (i32, i32) {
    %c0_i32 = arith.constant 0 : i32
    %c0_i32_0 = arith.constant 0 : i32
    %c0_i32_1 = arith.constant 0 : i32
    return %c0_i32, %c0_i32_0 : i32, i32
  }
  func.func @transform_2(%arg0: i32) -> (i32, i32) {
    %c0_i32 = arith.constant 0 : i32
    %c0_i32_0 = arith.constant 0 : i32
    return %arg0, %c0_i32 : i32, i32
  }
  func.func @transform_3(%arg0: i32) -> (i32, i32, i32) {
    %c0_i32 = arith.constant 0 : i32
    %c0_i32_0 = arith.constant 0 : i32
    %c0_i32_1 = arith.constant 0 : i32
    return %arg0, %c0_i32, %c0_i32_0 : i32, i32, i32
  }
}

module attributes {stable_mosaic.version = 11 : i64} {
  func.func @_bn_relu_kernel(%arg0: i32, %arg1: memref<512x128xbf16, #tpu.memory_space<vmem>>, %arg2: memref<1x128xf32, #tpu.memory_space<vmem>>, %arg3: memref<1x128xf32, #tpu.memory_space<vmem>>, %arg4: memref<512x128xbf16, #tpu.memory_space<vmem>>) attributes {dimension_semantics = [#tpu.dimension_semantics<parallel>], iteration_bounds = array<i64: 1>, scalar_prefetch = 0 : i64, scratch_operands = 0 : i64, tpu.core_type = #tpu.core_type<tc>, window_params = [{transform_indices = @transform_0, window_bounds = array<i64: 512, 128>}, {pipeline_mode = #tpu.pipeline_mode<synchronous>, transform_indices = @transform_1, window_bounds = array<i64: 1, 128>}, {pipeline_mode = #tpu.pipeline_mode<synchronous>, transform_indices = @transform_2, window_bounds = array<i64: 1, 128>}, {transform_indices = @transform_3, window_bounds = array<i64: 512, 128>}]} {
    %c0 = arith.constant 0 : index
    %c0_0 = arith.constant 0 : index
    %0 = vector.load %arg1[%c0, %c0_0] : memref<512x128xbf16, #tpu.memory_space<vmem>>, vector<512x128xbf16>
    %1 = arith.extf %0 : vector<512x128xbf16> to vector<512x128xf32>
    %c0_1 = arith.constant 0 : index
    %c0_2 = arith.constant 0 : index
    %2 = vector.load %arg2[%c0_1, %c0_2] : memref<1x128xf32, #tpu.memory_space<vmem>>, vector<1x128xf32>
    %3 = vector.broadcast %2 : vector<1x128xf32> to vector<512x128xf32>
    %4 = arith.mulf %1, %3 : vector<512x128xf32>
    %c0_3 = arith.constant 0 : index
    %c0_4 = arith.constant 0 : index
    %5 = vector.load %arg3[%c0_3, %c0_4] : memref<1x128xf32, #tpu.memory_space<vmem>>, vector<1x128xf32>
    %6 = vector.broadcast %5 : vector<1x128xf32> to vector<512x128xf32>
    %7 = arith.addf %4, %6 : vector<512x128xf32>
    %cst = arith.constant 0.000000e+00 : f32
    %8 = vector.broadcast %cst : f32 to vector<512x128xf32>
    %9 = arith.maximumf %7, %8 : vector<512x128xf32>
    %10 = arith.truncf %9 : vector<512x128xf32> to vector<512x128xbf16>
    %c0_5 = arith.constant 0 : index
    %c0_6 = arith.constant 0 : index
    %11 = vector.load %arg4[%c0_5, %c0_6] : memref<512x128xbf16, #tpu.memory_space<vmem>>, vector<512x128xbf16>
    tpu.vector_store %arg4[%c0_5, %c0_6], %10 {strides = array<i32>} : memref<512x128xbf16, #tpu.memory_space<vmem>>, vector<512x128xbf16>,
    return
  }
  func.func @transform_0(%arg0: i32) -> (i32, i32) {
    %c0_i32 = arith.constant 0 : i32
    %c0_i32_0 = arith.constant 0 : i32
    return %arg0, %c0_i32 : i32, i32
  }
  func.func @transform_1(%arg0: i32) -> (i32, i32) {
    %c0_i32 = arith.constant 0 : i32
    %c0_i32_0 = arith.constant 0 : i32
    %c0_i32_1 = arith.constant 0 : i32
    return %c0_i32, %c0_i32_0 : i32, i32
  }
  func.func @transform_2(%arg0: i32) -> (i32, i32) {
    %c0_i32 = arith.constant 0 : i32
    %c0_i32_0 = arith.constant 0 : i32
    %c0_i32_1 = arith.constant 0 : i32
    return %c0_i32, %c0_i32_0 : i32, i32
  }
  func.func @transform_3(%arg0: i32) -> (i32, i32) {
    %c0_i32 = arith.constant 0 : i32
    %c0_i32_0 = arith.constant 0 : i32
    return %arg0, %c0_i32 : i32, i32
  }
}

</mosaic_0001>

<llo_original>
// kernel: bn_conv2d.3
$region0: #{bn_conv2d.3}
  #allocation0 [shape = 'u32[]', space=smem, size = 0x4, offset = 0x4, fixed_abs, tag = 'smem constant byte address 0x4 - core index']
  #allocation1 [shape = 'u32[144,128]{1,0:T(1,128)}', space=vmem, size = 0x12000, scoped, tag = 'internal scratch']
  %s0 = inlined_call_operand.vmem [shape: bf16[512,128], index: 0, kind: input, shape index: {}]
  %s1 = inlined_call_operand.vmem [shape: f32[1,128], index: 1, kind: input, shape index: {}]
  %s2 = inlined_call_operand.vmem [shape: f32[1,128], index: 2, kind: input, shape index: {}]
  %s3 = inlined_call_operand.vmem [shape: bf16[512,128], index: 3, kind: output, shape index: {}]
  %s4 = sld [smem:[#allocation0]]
  $region22: #{bn_conv2d.3} parent=0
    _
  %s6 = ssub.s32 1, %s4
  %s7 = scalar_select 0, %s6, %s4
  // Predicated region
  $region2: #{bn_conv2d.3} parent=0 // pred_check
    _
  $region3: #{bn_conv2d.3} parent=0 // pred_check_branch
    %9 = sbr.rel (0) target = $region5
  $region4: #{bn_conv2d.3} parent=0 // pred_region
    _
  $region5: #{bn_conv2d.3} parent=0 // pred_fallthru
    _
  // Predicated region
  $region6: #{bn_conv2d.3} parent=0 // pred_check
    _
  $region7: #{bn_conv2d.3} parent=0 // pred_check_branch
    %11 = sbr.rel (0) target = $region9
  $region8: #{bn_conv2d.3} parent=0 // pred_region
    _
  $region9: #{bn_conv2d.3} parent=0 // pred_fallthru
    _
  // Predicated region
  $region10: #{bn_conv2d.3} parent=0 // pred_check
    _
  $region11: #{bn_conv2d.3} parent=0 // pred_check_branch
    %13 = sbr.rel (0) target = $region13
  $region12: #{bn_conv2d.3} parent=0 // pred_region
    _
  $region13: #{bn_conv2d.3} parent=0 // pred_fallthru
    _
  %v14 = vld [vmem:[%s0] sm:$0xf]
  %v15 = vld [vmem:[%s0 + $0x4] sm:$0xf]
  %v16 = vld [vmem:[%s0 + $0x8] sm:$0xf]
  %v17 = vld [vmem:[%s0 + $0xc] sm:$0xf]
  %v18 = vld [vmem:[%s0 + $0x10] sm:$0xf]
  %v19 = vld [vmem:[%s0 + $0x14] sm:$0xf]
  %v20 = vld [vmem:[%s0 + $0x18] sm:$0xf]
  %v21 = vld [vmem:[%s0 + $0x1c] sm:$0xf]
  %v22 = vld [vmem:[%s0 + $0x20] sm:$0xf]
  %v23 = vld [vmem:[%s0 + $0x24] sm:$0xf]
  %v24 = vld [vmem:[%s0 + $0x28] sm:$0xf]
  %v25 = vld [vmem:[%s0 + $0x2c] sm:$0xf]
  %v26 = vld [vmem:[%s0 + $0x30] sm:$0xf]
  %v27 = vld [vmem:[%s0 + $0x34] sm:$0xf]
  %v28 = vld [vmem:[%s0 + $0x38] sm:$0xf]
  %v29 = vld [vmem:[%s0 + $0x3c] sm:$0xf]
  %v30 = vld [vmem:[%s0 + $0x40] sm:$0xf]
  %v31 = vld [vmem:[%s0 + $0x44] sm:$0xf]
  %v32 = vld [vmem:[%s0 + $0x48] sm:$0xf]
  %v33 = vld [vmem:[%s0 + $0x4c] sm:$0xf]
  %v34 = vld [vmem:[%s0 + $0x50] sm:$0xf]
  %v35 = vld [vmem:[%s0 + $0x54] sm:$0xf]
  %v36 = vld [vmem:[%s0 + $0x58] sm:$0xf]
  %v37 = vld [vmem:[%s0 + $0x5c] sm:$0xf]
  %v38 = vld [vmem:[%s0 + $0x60] sm:$0xf]
  %v39 = vld [vmem:[%s0 + $0x64] sm:$0xf]
  %v40 = vld [vmem:[%s0 + $0x68] sm:$0xf]
  %v41 = vld [vmem:[%s0 + $0x6c] sm:$0xf]
  %v42 = vld [vmem:[%s0 + $0x70] sm:$0xf]
  %v43 = vld [vmem:[%s0 + $0x74] sm:$0xf]
  %v44 = vld [vmem:[%s0 + $0x78] sm:$0xf]
  %v45 = vld [vmem:[%s0 + $0x7c] sm:$0xf]
  %v46 = vld [vmem:[%s0 + $0x80] sm:$0xf]
  %v47 = vld [vmem:[%s0 + $0x84] sm:$0xf]
  %v48 = vld [vmem:[%s0 + $0x88] sm:$0xf]
  %v49 = vld [vmem:[%s0 + $0x8c] sm:$0xf]
  %v50 = vld [vmem:[%s0 + $0x90] sm:$0xf]
  %v51 = vld [vmem:[%s0 + $0x94] sm:$0xf]
  %v52 = vld [vmem:[%s0 + $0x98] sm:$0xf]
  %v53 = vld [vmem:[%s0 + $0x9c] sm:$0xf]
  %v54 = vld [vmem:[%s0 + $0xa0] sm:$0xf]
  %v55 = vld [vmem:[%s0 + $0xa4] sm:$0xf]
  %v56 = vld [vmem:[%s0 + $0xa8] sm:$0xf]
  %v57 = vld [vmem:[%s0 + $0xac] sm:$0xf]
  %v58 = vld [vmem:[%s0 + $0xb0] sm:$0xf]
  %v59 = vld [vmem:[%s0 + $0xb4] sm:$0xf]
  %v60 = vld [vmem:[%s0 + $0xb8] sm:$0xf]
  %v61 = vld [vmem:[%s0 + $0xbc] sm:$0xf]
  %v62 = vld [vmem:[%s0 + $0xc0] sm:$0xf]
  %v63 = vld [vmem:[%s0 + $0xc4] sm:$0xf]
  %v64 = vld [vmem:[%s0 + $0xc8] sm:$0xf]
  %v65 = vld [vmem:[%s0 + $0xcc] sm:$0xf]
  %v66 = vld [vmem:[%s0 + $0xd0] sm:$0xf]
  %v67 = vld [vmem:[%s0 + $0xd4] sm:$0xf]
  %v68 = vld [vmem:[%s0 + $0xd8] sm:$0xf]
  %v69 = vld [vmem:[%s0 + $0xdc] sm:$0xf]
  %v70 = vld [vmem:[%s0 + $0xe0] sm:$0xf]
  %v71 = vld [vmem:[%s0 + $0xe4] sm:$0xf]
  %v72 = vld [vmem:[%s0 + $0xe8] sm:$0xf]
  %v73 = vld [vmem:[%s0 + $0xec] sm:$0xf]
  %v74 = vld [vmem:[%s0 + $0xf0] sm:$0xf]
  %v75 = vld [vmem:[%s0 + $0xf4] sm:$0xf]
  %v76 = vld [vmem:[%s0 + $0xf8] sm:$0xf]
  %v77 = vld [vmem:[%s0 + $0xfc] sm:$0xf]
  %v78 = vunpack.c.l.bf16 %v14
  %v79 = vunpack.c.l.bf16 %v15
  %v80 = vunpack.c.l.bf16 %v16
  %v81 = vunpack.c.l.bf16 %v17
  %v82 = vunpack.c.l.bf16 %v18
  %v83 = vunpack.c.l.bf16 %v19
  %v84 = vunpack.c.l.bf16 %v20
  %v85 = vunpack.c.l.bf16 %v21
  %v86 = vunpack.c.l.bf16 %v22
  %v87 = vunpack.c.l.bf16 %v23
  %v88 = vunpack.c.l.bf16 %v24
  %v89 = vunpack.c.l.bf16 %v25
  %v90 = vunpack.c.l.bf16 %v26
  %v91 = vunpack.c.l.bf16 %v27
  %v92 = vunpack.c.l.bf16 %v28
  %v93 = vunpack.c.l.bf16 %v29
  %v94 = vunpack.c.l.bf16 %v30
  %v95 = vunpack.c.l.bf16 %v31
  %v96 = vunpack.c.l.bf16 %v32
  %v97 = vunpack.c.l.bf16 %v33
  %v98 = vunpack.c.l.bf16 %v34
  %v99 = vunpack.c.l.bf16 %v35
  %v100 = vunpack.c.l.bf16 %v36
  %v101 = vunpack.c.l.bf16 %v37
  %v102 = vunpack.c.l.bf16 %v38
  %v103 = vunpack.c.l.bf16 %v39
  %v104 = vunpack.c.l.bf16 %v40
  %v105 = vunpack.c.l.bf16 %v41
  %v106 = vunpack.c.l.bf16 %v42
  %v107 = vunpack.c.l.bf16 %v43
  %v108 = vunpack.c.l.bf16 %v44
  %v109 = vunpack.c.l.bf16 %v45
  %v110 = vunpack.c.l.bf16 %v46
  %v111 = vunpack.c.l.bf16 %v47
  %v112 = vunpack.c.l.bf16 %v48
  %v113 = vunpack.c.l.bf16 %v49
  %v114 = vunpack.c.l.bf16 %v50
  %v115 = vunpack.c.l.bf16 %v51
  %v116 = vunpack.c.l.bf16 %v52
  %v117 = vunpack.c.l.bf16 %v53
  %v118 = vunpack.c.l.bf16 %v54
  %v119 = vunpack.c.l.bf16 %v55
  %v120 = vunpack.c.l.bf16 %v56
  %v121 = vunpack.c.l.bf16 %v57
  %v122 = vunpack.c.l.bf16 %v58
  %v123 = vunpack.c.l.bf16 %v59
  %v124 = vunpack.c.l.bf16 %v60
  %v125 = vunpack.c.l.bf16 %v61
  %v126 = vunpack.c.l.bf16 %v62
  %v127 = vunpack.c.l.bf16 %v63
  %v128 = vunpack.c.l.bf16 %v64
  %v129 = vunpack.c.l.bf16 %v65
  %v130 = vunpack.c.l.bf16 %v66
  %v131 = vunpack.c.l.bf16 %v67
  %v132 = vunpack.c.l.bf16 %v68
  %v133 = vunpack.c.l.bf16 %v69
  %v134 = vunpack.c.l.bf16 %v70
  %v135 = vunpack.c.l.bf16 %v71
  %v136 = vunpack.c.l.bf16 %v72
  %v137 = vunpack.c.l.bf16 %v73
  %v138 = vunpack.c.l.bf16 %v74
  %v139 = vunpack.c.l.bf16 %v75
  %v140 = vunpack.c.l.bf16 %v76
  %v141 = vunpack.c.l.bf16 %v77
  %v142 = vld [vmem:[%s1] sm:$0x1]
  %v144 = vlaneseq
  %v145 = vshrl.u32 %v144, 7
  %v146 = vsub.s32 0, %v145
  %v147 = vrot.slane %v142, %v146
  %v149 = vmul.f32 %v78, %v147
  %v150 = vmul.f32 %v79, %v147
  %v151 = vmul.f32 %v80, %v147
  %v152 = vmul.f32 %v81, %v147
  %v153 = vmul.f32 %v82, %v147
  %v154 = vmul.f32 %v83, %v147
  %v155 = vmul.f32 %v84, %v147
  %v156 = vmul.f32 %v85, %v147
  %v157 = vmul.f32 %v86, %v147
  %v158 = vmul.f32 %v87, %v147
  %v159 = vmul.f32 %v88, %v147
  %v160 = vmul.f32 %v89, %v147
  %v161 = vmul.f32 %v90, %v147
  %v162 = vmul.f32 %v91, %v147
  %v163 = vmul.f32 %v92, %v147
  %v164 = vmul.f32 %v93, %v147
  %v165 = vmul.f32 %v94, %v147
  %v166 = vmul.f32 %v95, %v147
  %v167 = vmul.f32 %v96, %v147
  %v168 = vmul.f32 %v97, %v147
  %v169 = vmul.f32 %v98, %v147
  %v170 = vmul.f32 %v99, %v147
  %v171 = vmul.f32 %v100, %v147
  %v172 = vmul.f32 %v101, %v147
  %v173 = vmul.f32 %v102, %v147
  %v174 = vmul.f32 %v103, %v147
  %v175 = vmul.f32 %v104, %v147
  %v176 = vmul.f32 %v105, %v147
  %v177 = vmul.f32 %v106, %v147
  %v178 = vmul.f32 %v107, %v147
  %v179 = vmul.f32 %v108, %v147
  %v180 = vmul.f32 %v109, %v147
  %v181 = vmul.f32 %v110, %v147
  %v182 = vmul.f32 %v111, %v147
  %v183 = vmul.f32 %v112, %v147
  %v184 = vmul.f32 %v113, %v147
  %v185 = vmul.f32 %v114, %v147
  %v186 = vmul.f32 %v115, %v147
  %v187 = vmul.f32 %v116, %v147
  %v188 = vmul.f32 %v117, %v147
  %v189 = vmul.f32 %v118, %v147
  %v190 = vmul.f32 %v119, %v147
  %v191 = vmul.f32 %v120, %v147
  %v192 = vmul.f32 %v121, %v147
  %v193 = vmul.f32 %v122, %v147
  %v194 = vmul.f32 %v123, %v147
  %v195 = vmul.f32 %v124, %v147
  %v196 = vmul.f32 %v125, %v147
  %v197 = vmul.f32 %v126, %v147
  %v198 = vmul.f32 %v127, %v147
  %v199 = vmul.f32 %v128, %v147
  %v200 = vmul.f32 %v129, %v147
  %v201 = vmul.f32 %v130, %v147
  %v202 = vmul.f32 %v131, %v147
  %v203 = vmul.f32 %v132, %v147
  %v204 = vmul.f32 %v133, %v147
  %v205 = vmul.f32 %v134, %v147
  %v206 = vmul.f32 %v135, %v147
  %v207 = vmul.f32 %v136, %v147
  %v208 = vmul.f32 %v137, %v147
  %v209 = vmul.f32 %v138, %v147
  %v210 = vmul.f32 %v139, %v147
  %v211 = vmul.f32 %v140, %v147
  %v212 = vmul.f32 %v141, %v147
  %v213 = vld [vmem:[%s2] sm:$0x1]
  %v215 = vlaneseq
  %v216 = vshrl.u32 %v215, 7
  %v217 = vsub.s32 0, %v216
  %v218 = vrot.slane %v213, %v217
  %v220 = vadd.f32 %v149, %v218
  %v221 = vadd.f32 %v150, %v218
  %v222 = vadd.f32 %v151, %v218
  %v223 = vadd.f32 %v152, %v218
  %v224 = vadd.f32 %v153, %v218
  %v225 = vadd.f32 %v154, %v218
  %v226 = vadd.f32 %v155, %v218
  %v227 = vadd.f32 %v156, %v218
  %v228 = vadd.f32 %v157, %v218
  %v229 = vadd.f32 %v158, %v218
  %v230 = vadd.f32 %v159, %v218
  %v231 = vadd.f32 %v160, %v218
  %v232 = vadd.f32 %v161, %v218
  %v233 = vadd.f32 %v162, %v218
  %v234 = vadd.f32 %v163, %v218
  %v235 = vadd.f32 %v164, %v218
  %v236 = vadd.f32 %v165, %v218
  %v237 = vadd.f32 %v166, %v218
  %v238 = vadd.f32 %v167, %v218
  %v239 = vadd.f32 %v168, %v218
  %v240 = vadd.f32 %v169, %v218
  %v241 = vadd.f32 %v170, %v218
  %v242 = vadd.f32 %v171, %v218
  %v243 = vadd.f32 %v172, %v218
  %v244 = vadd.f32 %v173, %v218
  %v245 = vadd.f32 %v174, %v218
  %v246 = vadd.f32 %v175, %v218
  %v247 = vadd.f32 %v176, %v218
  %v248 = vadd.f32 %v177, %v218
  %v249 = vadd.f32 %v178, %v218
  %v250 = vadd.f32 %v179, %v218
  %v251 = vadd.f32 %v180, %v218
  %v252 = vadd.f32 %v181, %v218
  %v253 = vadd.f32 %v182, %v218
  %v254 = vadd.f32 %v183, %v218
  %v255 = vadd.f32 %v184, %v218
  %v256 = vadd.f32 %v185, %v218
  %v257 = vadd.f32 %v186, %v218
  %v258 = vadd.f32 %v187, %v218
  %v259 = vadd.f32 %v188, %v218
  %v260 = vadd.f32 %v189, %v218
  %v261 = vadd.f32 %v190, %v218
  %v262 = vadd.f32 %v191, %v218
  %v263 = vadd.f32 %v192, %v218
  %v264 = vadd.f32 %v193, %v218
  %v265 = vadd.f32 %v194, %v218
  %v266 = vadd.f32 %v195, %v218
  %v267 = vadd.f32 %v196, %v218
  %v268 = vadd.f32 %v197, %v218
  %v269 = vadd.f32 %v198, %v218
  %v270 = vadd.f32 %v199, %v218
  %v271 = vadd.f32 %v200, %v218
  %v272 = vadd.f32 %v201, %v218
  %v273 = vadd.f32 %v202, %v218
  %v274 = vadd.f32 %v203, %v218
  %v275 = vadd.f32 %v204, %v218
  %v276 = vadd.f32 %v205, %v218
  %v277 = vadd.f32 %v206, %v218
  %v278 = vadd.f32 %v207, %v218
  %v279 = vadd.f32 %v208, %v218
  %v280 = vadd.f32 %v209, %v218
  %v281 = vadd.f32 %v210, %v218
  %v282 = vadd.f32 %v211, %v218
  %v283 = vadd.f32 %v212, %v218
  %v284 = vmax.f32 %v220, 0.0
  %v285 = vmax.f32 %v221, 0.0
  %v286 = vmax.f32 %v222, 0.0
  %v287 = vmax.f32 %v223, 0.0
  %v288 = vmax.f32 %v224, 0.0
  %v289 = vmax.f32 %v225, 0.0
  %v290 = vmax.f32 %v226, 0.0
  %v291 = vmax.f32 %v227, 0.0
  %v292 = vmax.f32 %v228, 0.0
  %v293 = vmax.f32 %v229, 0.0
  %v294 = vmax.f32 %v230, 0.0
  %v295 = vmax.f32 %v231, 0.0
  %v296 = vmax.f32 %v232, 0.0
  %v297 = vmax.f32 %v233, 0.0
  %v298 = vmax.f32 %v234, 0.0
  %v299 = vmax.f32 %v235, 0.0
  %v300 = vmax.f32 %v236, 0.0
  %v301 = vmax.f32 %v237, 0.0
  %v302 = vmax.f32 %v238, 0.0
  %v303 = vmax.f32 %v239, 0.0
  %v304 = vmax.f32 %v240, 0.0
  %v305 = vmax.f32 %v241, 0.0
  %v306 = vmax.f32 %v242, 0.0
  %v307 = vmax.f32 %v243, 0.0
  %v308 = vmax.f32 %v244, 0.0
  %v309 = vmax.f32 %v245, 0.0
  %v310 = vmax.f32 %v246, 0.0
  %v311 = vmax.f32 %v247, 0.0
  %v312 = vmax.f32 %v248, 0.0
  %v313 = vmax.f32 %v249, 0.0
  %v314 = vmax.f32 %v250, 0.0
  %v315 = vmax.f32 %v251, 0.0
  %v316 = vmax.f32 %v252, 0.0
  %v317 = vmax.f32 %v253, 0.0
  %v318 = vmax.f32 %v254, 0.0
  %v319 = vmax.f32 %v255, 0.0
  %v320 = vmax.f32 %v256, 0.0
  %v321 = vmax.f32 %v257, 0.0
  %v322 = vmax.f32 %v258, 0.0
  %v323 = vmax.f32 %v259, 0.0
  %v324 = vmax.f32 %v260, 0.0
  %v325 = vmax.f32 %v261, 0.0
  %v326 = vmax.f32 %v262, 0.0
  %v327 = vmax.f32 %v263, 0.0
  %v328 = vmax.f32 %v264, 0.0
  %v329 = vmax.f32 %v265, 0.0
  %v330 = vmax.f32 %v266, 0.0
  %v331 = vmax.f32 %v267, 0.0
  %v332 = vmax.f32 %v268, 0.0
  %v333 = vmax.f32 %v269, 0.0
  %v334 = vmax.f32 %v270, 0.0
  %v335 = vmax.f32 %v271, 0.0
  %v336 = vmax.f32 %v272, 0.0
  %v337 = vmax.f32 %v273, 0.0
  %v338 = vmax.f32 %v274, 0.0
  %v339 = vmax.f32 %v275, 0.0
  %v340 = vmax.f32 %v276, 0.0
  %v341 = vmax.f32 %v277, 0.0
  %v342 = vmax.f32 %v278, 0.0
  %v343 = vmax.f32 %v279, 0.0
  %v344 = vmax.f32 %v280, 0.0
  %v345 = vmax.f32 %v281, 0.0
  %v346 = vmax.f32 %v282, 0.0
  %v347 = vmax.f32 %v283, 0.0
  %v348 = vpack.c.bf16 %v285, %v284
  %v349 = vpack.c.bf16 %v287, %v286
  %v350 = vpack.c.bf16 %v289, %v288
  %v351 = vpack.c.bf16 %v291, %v290
  %v352 = vpack.c.bf16 %v293, %v292
  %v353 = vpack.c.bf16 %v295, %v294
  %v354 = vpack.c.bf16 %v297, %v296
  %v355 = vpack.c.bf16 %v299, %v298
  %v356 = vpack.c.bf16 %v301, %v300
  %v357 = vpack.c.bf16 %v303, %v302
  %v358 = vpack.c.bf16 %v305, %v304
  %v359 = vpack.c.bf16 %v307, %v306
  %v360 = vpack.c.bf16 %v309, %v308
  %v361 = vpack.c.bf16 %v311, %v310
  %v362 = vpack.c.bf16 %v313, %v312
  %v363 = vpack.c.bf16 %v315, %v314
  %v364 = vpack.c.bf16 %v317, %v316
  %v365 = vpack.c.bf16 %v319, %v318
  %v366 = vpack.c.bf16 %v321, %v320
  %v367 = vpack.c.bf16 %v323, %v322
  %v368 = vpack.c.bf16 %v325, %v324
  %v369 = vpack.c.bf16 %v327, %v326
  %v370 = vpack.c.bf16 %v329, %v328
  %v371 = vpack.c.bf16 %v331, %v330
  %v372 = vpack.c.bf16 %v333, %v332
  %v373 = vpack.c.bf16 %v335, %v334
  %v374 = vpack.c.bf16 %v337, %v336
  %v375 = vpack.c.bf16 %v339, %v338
  %v376 = vpack.c.bf16 %v341, %v340
  %v377 = vpack.c.bf16 %v343, %v342
  %v378 = vpack.c.bf16 %v345, %v344
  %v379 = vpack.c.bf16 %v347, %v346
  %v412 = vunpack.c.l.b16 %v348
  %v413 = vunpack.c.h.b16 %v348
  %v414 = vunpack.c.l.b16 %v349
  %v415 = vunpack.c.h.b16 %v349
  %v416 = vunpack.c.l.b16 %v350
  %v417 = vunpack.c.h.b16 %v350
  %v418 = vunpack.c.l.b16 %v351
  %v419 = vunpack.c.h.b16 %v351
  %v420 = vunpack.c.l.b16 %v352
  %v421 = vunpack.c.h.b16 %v352
  %v422 = vunpack.c.l.b16 %v353
  %v423 = vunpack.c.h.b16 %v353
  %v424 = vunpack.c.l.b16 %v354
  %v425 = vunpack.c.h.b16 %v354
  %v426 = vunpack.c.l.b16 %v355
  %v427 = vunpack.c.h.b16 %v355
  %v428 = vunpack.c.l.b16 %v356
  %v429 = vunpack.c.h.b16 %v356
  %v430 = vunpack.c.l.b16 %v357
  %v431 = vunpack.c.h.b16 %v357
  %v432 = vunpack.c.l.b16 %v358
  %v433 = vunpack.c.h.b16 %v358
  %v434 = vunpack.c.l.b16 %v359
  %v435 = vunpack.c.h.b16 %v359
  %v436 = vunpack.c.l.b16 %v360
  %v437 = vunpack.c.h.b16 %v360
  %v438 = vunpack.c.l.b16 %v361
  %v439 = vunpack.c.h.b16 %v361
  %v440 = vunpack.c.l.b16 %v362
  %v441 = vunpack.c.h.b16 %v362
  %v442 = vunpack.c.l.b16 %v363
  %v443 = vunpack.c.h.b16 %v363
  %v444 = vunpack.c.l.b16 %v364
  %v445 = vunpack.c.h.b16 %v364
  %v446 = vunpack.c.l.b16 %v365
  %v447 = vunpack.c.h.b16 %v365
  %v448 = vunpack.c.l.b16 %v366
  %v449 = vunpack.c.h.b16 %v366
  %v450 = vunpack.c.l.b16 %v367
  %v451 = vunpack.c.h.b16 %v367
  %v452 = vunpack.c.l.b16 %v368
  %v453 = vunpack.c.h.b16 %v368
  %v454 = vunpack.c.l.b16 %v369
  %v455 = vunpack.c.h.b16 %v369
  %v456 = vunpack.c.l.b16 %v370
  %v457 = vunpack.c.h.b16 %v370
  %v458 = vunpack.c.l.b16 %v371
  %v459 = vunpack.c.h.b16 %v371
  %v460 = vunpack.c.l.b16 %v372
  %v461 = vunpack.c.h.b16 %v372
  %v462 = vunpack.c.l.b16 %v373
  %v463 = vunpack.c.h.b16 %v373
  %v464 = vunpack.c.l.b16 %v374
  %v465 = vunpack.c.h.b16 %v374
  %v466 = vunpack.c.l.b16 %v375
  %v467 = vunpack.c.h.b16 %v375
  %v468 = vunpack.c.l.b16 %v376
  %v469 = vunpack.c.h.b16 %v376
  %v470 = vunpack.c.l.b16 %v377
  %v471 = vunpack.c.h.b16 %v377
  %v472 = vunpack.c.l.b16 %v378
  %v473 = vunpack.c.h.b16 %v378
  %v474 = vunpack.c.l.b16 %v379
  %v475 = vunpack.c.h.b16 %v379
  %v476 = vpack.c.b16 %v412, %v412
  %v477 = vpack.c.b16 %v413, %v413
  %v478 = vpack.c.b16 %v414, %v414
  %v479 = vpack.c.b16 %v415, %v415
  %v480 = vpack.c.b16 %v416, %v416
  %v481 = vpack.c.b16 %v417, %v417
  %v482 = vpack.c.b16 %v418, %v418
  %v483 = vpack.c.b16 %v419, %v419
  %v484 = vpack.c.b16 %v420, %v420
  %v485 = vpack.c.b16 %v421, %v421
  %v486 = vpack.c.b16 %v422, %v422
  %v487 = vpack.c.b16 %v423, %v423
  %v488 = vpack.c.b16 %v424, %v424
  %v489 = vpack.c.b16 %v425, %v425
  %v490 = vpack.c.b16 %v426, %v426
  %v491 = vpack.c.b16 %v427, %v427
  %v492 = vpack.c.b16 %v428, %v428
  %v493 = vpack.c.b16 %v429, %v429
  %v494 = vpack.c.b16 %v430, %v430
  %v495 = vpack.c.b16 %v431, %v431
  %v496 = vpack.c.b16 %v432, %v432
  %v497 = vpack.c.b16 %v433, %v433
  %v498 = vpack.c.b16 %v434, %v434
  %v499 = vpack.c.b16 %v435, %v435
  %v500 = vpack.c.b16 %v436, %v436
  %v501 = vpack.c.b16 %v437, %v437
  %v502 = vpack.c.b16 %v438, %v438
  %v503 = vpack.c.b16 %v439, %v439
  %v504 = vpack.c.b16 %v440, %v440
  %v505 = vpack.c.b16 %v441, %v441
  %v506 = vpack.c.b16 %v442, %v442
  %v507 = vpack.c.b16 %v443, %v443
  %v508 = vpack.c.b16 %v444, %v444
  %v509 = vpack.c.b16 %v445, %v445
  %v510 = vpack.c.b16 %v446, %v446
  %v511 = vpack.c.b16 %v447, %v447
  %v512 = vpack.c.b16 %v448, %v448
  %v513 = vpack.c.b16 %v449, %v449
  %v514 = vpack.c.b16 %v450, %v450
  %v515 = vpack.c.b16 %v451, %v451
  %v516 = vpack.c.b16 %v452, %v452
  %v517 = vpack.c.b16 %v453, %v453
  %v518 = vpack.c.b16 %v454, %v454
  %v519 = vpack.c.b16 %v455, %v455
  %v520 = vpack.c.b16 %v456, %v456
  %v521 = vpack.c.b16 %v457, %v457
  %v522 = vpack.c.b16 %v458, %v458
  %v523 = vpack.c.b16 %v459, %v459
  %v524 = vpack.c.b16 %v460, %v460
  %v525 = vpack.c.b16 %v461, %v461
  %v526 = vpack.c.b16 %v462, %v462
  %v527 = vpack.c.b16 %v463, %v463
  %v528 = vpack.c.b16 %v464, %v464
  %v529 = vpack.c.b16 %v465, %v465
  %v530 = vpack.c.b16 %v466, %v466
  %v531 = vpack.c.b16 %v467, %v467
  %v532 = vpack.c.b16 %v468, %v468
  %v533 = vpack.c.b16 %v469, %v469
  %v534 = vpack.c.b16 %v470, %v470
  %v535 = vpack.c.b16 %v471, %v471
  %v536 = vpack.c.b16 %v472, %v472
  %v537 = vpack.c.b16 %v473, %v473
  %v538 = vpack.c.b16 %v474, %v474
  %v539 = vpack.c.b16 %v475, %v475
  %604 = vst [vmem:[%s3] sm:$0xf] %v476
  %605 = vst [vmem:[%s3 + $0x4] sm:$0xf] %v477
  %606 = vst [vmem:[%s3 + $0x8] sm:$0xf] %v478
  %607 = vst [vmem:[%s3 + $0xc] sm:$0xf] %v479
  %608 = vst [vmem:[%s3 + $0x10] sm:$0xf] %v480
  %609 = vst [vmem:[%s3 + $0x14] sm:$0xf] %v481
  %610 = vst [vmem:[%s3 + $0x18] sm:$0xf] %v482
  %611 = vst [vmem:[%s3 + $0x1c] sm:$0xf] %v483
  %612 = vst [vmem:[%s3 + $0x20] sm:$0xf] %v484
  %613 = vst [vmem:[%s3 + $0x24] sm:$0xf] %v485
  %614 = vst [vmem:[%s3 + $0x28] sm:$0xf] %v486
  %615 = vst [vmem:[%s3 + $0x2c] sm:$0xf] %v487
  %616 = vst [vmem:[%s3 + $0x30] sm:$0xf] %v488
  %617 = vst [vmem:[%s3 + $0x34] sm:$0xf] %v489
  %618 = vst [vmem:[%s3 + $0x38] sm:$0xf] %v490
  %619 = vst [vmem:[%s3 + $0x3c] sm:$0xf] %v491
  %620 = vst [vmem:[%s3 + $0x40] sm:$0xf] %v492
  %621 = vst [vmem:[%s3 + $0x44] sm:$0xf] %v493
  %622 = vst [vmem:[%s3 + $0x48] sm:$0xf] %v494
  %623 = vst [vmem:[%s3 + $0x4c] sm:$0xf] %v495
  %624 = vst [vmem:[%s3 + $0x50] sm:$0xf] %v496
  %625 = vst [vmem:[%s3 + $0x54] sm:$0xf] %v497
  %626 = vst [vmem:[%s3 + $0x58] sm:$0xf] %v498
  %627 = vst [vmem:[%s3 + $0x5c] sm:$0xf] %v499
  %628 = vst [vmem:[%s3 + $0x60] sm:$0xf] %v500
  %629 = vst [vmem:[%s3 + $0x64] sm:$0xf] %v501
  %630 = vst [vmem:[%s3 + $0x68] sm:$0xf] %v502
  %631 = vst [vmem:[%s3 + $0x6c] sm:$0xf] %v503
  %632 = vst [vmem:[%s3 + $0x70] sm:$0xf] %v504
  %633 = vst [vmem:[%s3 + $0x74] sm:$0xf] %v505
  %634 = vst [vmem:[%s3 + $0x78] sm:$0xf] %v506
  %635 = vst [vmem:[%s3 + $0x7c] sm:$0xf] %v507
  %636 = vst [vmem:[%s3 + $0x80] sm:$0xf] %v508
  %637 = vst [vmem:[%s3 + $0x84] sm:$0xf] %v509
  %638 = vst [vmem:[%s3 + $0x88] sm:$0xf] %v510
  %639 = vst [vmem:[%s3 + $0x8c] sm:$0xf] %v511
  %640 = vst [vmem:[%s3 + $0x90] sm:$0xf] %v512
  %641 = vst [vmem:[%s3 + $0x94] sm:$0xf] %v513
  %642 = vst [vmem:[%s3 + $0x98] sm:$0xf] %v514
  %643 = vst [vmem:[%s3 + $0x9c] sm:$0xf] %v515
  %644 = vst [vmem:[%s3 + $0xa0] sm:$0xf] %v516
  %645 = vst [vmem:[%s3 + $0xa4] sm:$0xf] %v517
  %646 = vst [vmem:[%s3 + $0xa8] sm:$0xf] %v518
  %647 = vst [vmem:[%s3 + $0xac] sm:$0xf] %v519
  %648 = vst [vmem:[%s3 + $0xb0] sm:$0xf] %v520
  %649 = vst [vmem:[%s3 + $0xb4] sm:$0xf] %v521
  %650 = vst [vmem:[%s3 + $0xb8] sm:$0xf] %v522
  %651 = vst [vmem:[%s3 + $0xbc] sm:$0xf] %v523
  %652 = vst [vmem:[%s3 + $0xc0] sm:$0xf] %v524
  %653 = vst [vmem:[%s3 + $0xc4] sm:$0xf] %v525
  %654 = vst [vmem:[%s3 + $0xc8] sm:$0xf] %v526
  %655 = vst [vmem:[%s3 + $0xcc] sm:$0xf] %v527
  %656 = vst [vmem:[%s3 + $0xd0] sm:$0xf] %v528
  %657 = vst [vmem:[%s3 + $0xd4] sm:$0xf] %v529
  %658 = vst [vmem:[%s3 + $0xd8] sm:$0xf] %v530
  %659 = vst [vmem:[%s3 + $0xdc] sm:$0xf] %v531
  %660 = vst [vmem:[%s3 + $0xe0] sm:$0xf] %v532
  %661 = vst [vmem:[%s3 + $0xe4] sm:$0xf] %v533
  %662 = vst [vmem:[%s3 + $0xe8] sm:$0xf] %v534
  %663 = vst [vmem:[%s3 + $0xec] sm:$0xf] %v535
  %664 = vst [vmem:[%s3 + $0xf0] sm:$0xf] %v536
  %665 = vst [vmem:[%s3 + $0xf4] sm:$0xf] %v537
  %666 = vst [vmem:[%s3 + $0xf8] sm:$0xf] %v538
  %667 = vst [vmem:[%s3 + $0xfc] sm:$0xf] %v539
  // Predicated region
  $region14: #{bn_conv2d.3} parent=0 // pred_check
    _
  $region15: #{bn_conv2d.3} parent=0 // pred_check_branch
    %669 = sbr.rel (0) target = $region17
  $region16: #{bn_conv2d.3} parent=0 // pred_region
    _
  $region17: #{bn_conv2d.3} parent=0 // pred_fallthru
    _
  // Predicated region
  $region18: #{bn_conv2d.3} parent=0 // pred_check
    _
  $region19: #{bn_conv2d.3} parent=0 // pred_check_branch
    %671 = sbr.rel (0) target = $region21
  $region20: #{bn_conv2d.3} parent=0 // pred_region
    _
  $region21: #{bn_conv2d.3} parent=0 // pred_fallthru
    _

// kernel: bn_conv2d.2
$region0: #{bn_conv2d.2}
  #allocation0 [shape = 'u32[]', space=smem, size = 0x4, offset = 0x4, fixed_abs, tag = 'smem constant byte address 0x4 - core index']
  #allocation1 [shape = 'u32[144,128]{1,0:T(1,128)}', space=vmem, size = 0x12000, scoped, tag = 'internal scratch']
  %s0 = inlined_call_operand.vmem [shape: bf16[512,36], index: 0, kind: input, shape index: {}]
  %s1 = inlined_call_operand.vmem [shape: bf16[36,128], index: 1, kind: input, shape index: {}]
  %s2 = inlined_call_operand.vmem [shape: bf16[512,128], index: 2, kind: output, shape index: {0}]
  %s3 = inlined_call_operand.vmem [shape: f32[1,8,128], index: 3, kind: output, shape index: {1}]
  %4 = xla_tuple %s2, %s3
  %s5 = sld [smem:[#allocation0]]
  $region26: #{bn_conv2d.2} parent=0
    _
  %s7 = ssub.s32 1, %s5
  %s8 = scalar_select 0, %s7, %s5
  // Predicated region
  $region2: #{bn_conv2d.2} parent=0 // pred_check
    _
  $region3: #{bn_conv2d.2} parent=0 // pred_check_branch
    %10 = sbr.rel (0) target = $region5
  $region4: #{bn_conv2d.2} parent=0 // pred_region
    _
  $region5: #{bn_conv2d.2} parent=0 // pred_fallthru
    _
  // Predicated region
  $region6: #{bn_conv2d.2} parent=0 // pred_check
    _
  $region7: #{bn_conv2d.2} parent=0 // pred_check_branch
    %12 = sbr.rel (0) target = $region9
  $region8: #{bn_conv2d.2} parent=0 // pred_region
    _
  $region9: #{bn_conv2d.2} parent=0 // pred_fallthru
    _
  %v14 = vld [vmem:[%s0] sm:$0xf]
  %v15 = vld [vmem:[%s0 + $0x4] sm:$0xf]
  %v16 = vld [vmem:[%s0 + $0x8] sm:$0xf]
  %v17 = vld [vmem:[%s0 + $0xc] sm:$0xf]
  %v18 = vld [vmem:[%s0 + $0x10] sm:$0xf]
  %v19 = vld [vmem:[%s0 + $0x14] sm:$0xf]
  %v20 = vld [vmem:[%s0 + $0x18] sm:$0xf]
  %v21 = vld [vmem:[%s0 + $0x1c] sm:$0xf]
  %v22 = vld [vmem:[%s0 + $0x20] sm:$0xf]
  %v23 = vld [vmem:[%s0 + $0x24] sm:$0xf]
  %v24 = vld [vmem:[%s0 + $0x28] sm:$0xf]
  %v25 = vld [vmem:[%s0 + $0x2c] sm:$0xf]
  %v26 = vld [vmem:[%s0 + $0x30] sm:$0xf]
  %v27 = vld [vmem:[%s0 + $0x34] sm:$0xf]
  %v28 = vld [vmem:[%s0 + $0x38] sm:$0xf]
  %v29 = vld [vmem:[%s0 + $0x3c] sm:$0xf]
  %v30 = vld [vmem:[%s0 + $0x40] sm:$0xf]
  %v31 = vld [vmem:[%s0 + $0x44] sm:$0xf]
  %v32 = vld [vmem:[%s0 + $0x48] sm:$0xf]
  %v33 = vld [vmem:[%s0 + $0x4c] sm:$0xf]
  %v34 = vld [vmem:[%s0 + $0x50] sm:$0xf]
  %v35 = vld [vmem:[%s0 + $0x54] sm:$0xf]
  %v36 = vld [vmem:[%s0 + $0x58] sm:$0xf]
  %v37 = vld [vmem:[%s0 + $0x5c] sm:$0xf]
  %v38 = vld [vmem:[%s0 + $0x60] sm:$0xf]
  %v39 = vld [vmem:[%s0 + $0x64] sm:$0xf]
  %v40 = vld [vmem:[%s0 + $0x68] sm:$0xf]
  %v41 = vld [vmem:[%s0 + $0x6c] sm:$0xf]
  %v42 = vld [vmem:[%s0 + $0x70] sm:$0xf]
  %v43 = vld [vmem:[%s0 + $0x74] sm:$0xf]
  %v44 = vld [vmem:[%s0 + $0x78] sm:$0xf]
  %v45 = vld [vmem:[%s0 + $0x7c] sm:$0xf]
  %v46 = vld [vmem:[%s0 + $0x80] sm:$0xf]
  %v47 = vld [vmem:[%s0 + $0x84] sm:$0xf]
  %v48 = vld [vmem:[%s0 + $0x88] sm:$0xf]
  %v49 = vld [vmem:[%s0 + $0x8c] sm:$0xf]
  %v50 = vld [vmem:[%s0 + $0x90] sm:$0xf]
  %v51 = vld [vmem:[%s0 + $0x94] sm:$0xf]
  %v52 = vld [vmem:[%s0 + $0x98] sm:$0xf]
  %v53 = vld [vmem:[%s0 + $0x9c] sm:$0xf]
  %v54 = vld [vmem:[%s0 + $0xa0] sm:$0xf]
  %v55 = vld [vmem:[%s0 + $0xa4] sm:$0xf]
  %v56 = vld [vmem:[%s0 + $0xa8] sm:$0xf]
  %v57 = vld [vmem:[%s0 + $0xac] sm:$0xf]
  %v58 = vld [vmem:[%s0 + $0xb0] sm:$0xf]
  %v59 = vld [vmem:[%s0 + $0xb4] sm:$0xf]
  %v60 = vld [vmem:[%s0 + $0xb8] sm:$0xf]
  %v61 = vld [vmem:[%s0 + $0xbc] sm:$0xf]
  %v62 = vld [vmem:[%s0 + $0xc0] sm:$0xf]
  %v63 = vld [vmem:[%s0 + $0xc4] sm:$0xf]
  %v64 = vld [vmem:[%s0 + $0xc8] sm:$0xf]
  %v65 = vld [vmem:[%s0 + $0xcc] sm:$0xf]
  %v66 = vld [vmem:[%s0 + $0xd0] sm:$0xf]
  %v67 = vld [vmem:[%s0 + $0xd4] sm:$0xf]
  %v68 = vld [vmem:[%s0 + $0xd8] sm:$0xf]
  %v69 = vld [vmem:[%s0 + $0xdc] sm:$0xf]
  %v70 = vld [vmem:[%s0 + $0xe0] sm:$0xf]
  %v71 = vld [vmem:[%s0 + $0xe4] sm:$0xf]
  %v72 = vld [vmem:[%s0 + $0xe8] sm:$0xf]
  %v73 = vld [vmem:[%s0 + $0xec] sm:$0xf]
  %v74 = vld [vmem:[%s0 + $0xf0] sm:$0xf]
  %v75 = vld [vmem:[%s0 + $0xf4] sm:$0xf]
  %v76 = vld [vmem:[%s0 + $0xf8] sm:$0xf]
  %v77 = vld [vmem:[%s0 + $0xfc] sm:$0xf]
  %v78 = vld [vmem:[%s1] sm:$0xf]
  %v79 = vld [vmem:[%s1 + $0x4] sm:$0xf]
  %v80 = vld [vmem:[%s1 + $0x8] sm:$0xf]
  %v81 = vld [vmem:[%s1 + $0xc] sm:$0xf]
  %v82 = vld [vmem:[%s1 + $0x10] sm:$0x3]
  %v147 = vunpack.c.l.b16 %v14
  %v148 = vunpack.c.l.b16 %v15
  %v149 = vunpack.c.l.b16 %v16
  %v150 = vunpack.c.l.b16 %v17
  %v151 = vunpack.c.l.b16 %v18
  %v152 = vunpack.c.l.b16 %v19
  %v153 = vunpack.c.l.b16 %v20
  %v154 = vunpack.c.l.b16 %v21
  %v155 = vunpack.c.l.b16 %v22
  %v156 = vunpack.c.l.b16 %v23
  %v157 = vunpack.c.l.b16 %v24
  %v158 = vunpack.c.l.b16 %v25
  %v159 = vunpack.c.l.b16 %v26
  %v160 = vunpack.c.l.b16 %v27
  %v161 = vunpack.c.l.b16 %v28
  %v162 = vunpack.c.l.b16 %v29
  %v163 = vunpack.c.l.b16 %v30
  %v164 = vunpack.c.l.b16 %v31
  %v165 = vunpack.c.l.b16 %v32
  %v166 = vunpack.c.l.b16 %v33
  %v167 = vunpack.c.l.b16 %v34
  %v168 = vunpack.c.l.b16 %v35
  %v169 = vunpack.c.l.b16 %v36
  %v170 = vunpack.c.l.b16 %v37
  %v171 = vunpack.c.l.b16 %v38
  %v172 = vunpack.c.l.b16 %v39
  %v173 = vunpack.c.l.b16 %v40
  %v174 = vunpack.c.l.b16 %v41
  %v175 = vunpack.c.l.b16 %v42
  %v176 = vunpack.c.l.b16 %v43
  %v177 = vunpack.c.l.b16 %v44
  %v178 = vunpack.c.l.b16 %v45
  %v179 = vunpack.c.l.b16 %v46
  %v180 = vunpack.c.l.b16 %v47
  %v181 = vunpack.c.l.b16 %v48
  %v182 = vunpack.c.l.b16 %v49
  %v183 = vunpack.c.l.b16 %v50
  %v184 = vunpack.c.l.b16 %v51
  %v185 = vunpack.c.l.b16 %v52
  %v186 = vunpack.c.l.b16 %v53
  %v187 = vunpack.c.l.b16 %v54
  %v188 = vunpack.c.l.b16 %v55
  %v189 = vunpack.c.l.b16 %v56
  %v190 = vunpack.c.l.b16 %v57
  %v191 = vunpack.c.l.b16 %v58
  %v192 = vunpack.c.l.b16 %v59
  %v193 = vunpack.c.l.b16 %v60
  %v194 = vunpack.c.l.b16 %v61
  %v195 = vunpack.c.l.b16 %v62
  %v196 = vunpack.c.l.b16 %v63
  %v197 = vunpack.c.l.b16 %v64
  %v198 = vunpack.c.l.b16 %v65
  %v199 = vunpack.c.l.b16 %v66
  %v200 = vunpack.c.l.b16 %v67
  %v201 = vunpack.c.l.b16 %v68
  %v202 = vunpack.c.l.b16 %v69
  %v203 = vunpack.c.l.b16 %v70
  %v204 = vunpack.c.l.b16 %v71
  %v205 = vunpack.c.l.b16 %v72
  %v206 = vunpack.c.l.b16 %v73
  %v207 = vunpack.c.l.b16 %v74
  %v208 = vunpack.c.l.b16 %v75
  %v209 = vunpack.c.l.b16 %v76
  %v210 = vunpack.c.l.b16 %v77
  %v211 = vpack.c.b16 %v148, %v147
  %v212 = vpack.c.b16 %v150, %v149
  %v213 = vpack.c.b16 %v152, %v151
  %v214 = vpack.c.b16 %v154, %v153
  %v215 = vpack.c.b16 %v156, %v155
  %v216 = vpack.c.b16 %v158, %v157
  %v217 = vpack.c.b16 %v160, %v159
  %v218 = vpack.c.b16 %v162, %v161
  %v219 = vpack.c.b16 %v164, %v163
  %v220 = vpack.c.b16 %v166, %v165
  %v221 = vpack.c.b16 %v168, %v167
  %v222 = vpack.c.b16 %v170, %v169
  %v223 = vpack.c.b16 %v172, %v171
  %v224 = vpack.c.b16 %v174, %v173
  %v225 = vpack.c.b16 %v176, %v175
  %v226 = vpack.c.b16 %v178, %v177
  %v227 = vpack.c.b16 %v180, %v179
  %v228 = vpack.c.b16 %v182, %v181
  %v229 = vpack.c.b16 %v184, %v183
  %v230 = vpack.c.b16 %v186, %v185
  %v231 = vpack.c.b16 %v188, %v187
  %v232 = vpack.c.b16 %v190, %v189
  %v233 = vpack.c.b16 %v192, %v191
  %v234 = vpack.c.b16 %v194, %v193
  %v235 = vpack.c.b16 %v196, %v195
  %v236 = vpack.c.b16 %v198, %v197
  %v237 = vpack.c.b16 %v200, %v199
  %v238 = vpack.c.b16 %v202, %v201
  %v239 = vpack.c.b16 %v204, %v203
  %v240 = vpack.c.b16 %v206, %v205
  %v241 = vpack.c.b16 %v208, %v207
  %v242 = vpack.c.b16 %v210, %v209
  %v248 = vunpack.c.l.b16 %v78
  %v249 = vunpack.c.l.b16 %v79
  %v250 = vunpack.c.l.b16 %v80
  %v251 = vunpack.c.l.b16 %v81
  %v252 = vunpack.c.l.b16 %v82
  %v253 = vpack.c.b16 %v249, %v248
  %v254 = vpack.c.b16 %v251, %v250
  %v255 = vpack.c.b16 %v252, %v252
  %vm258 = vcmask 293888
  %v260 = vsel %vm258, %v211, 0
  %v263 = vsel %vm258, %v212, 0
  %v266 = vsel %vm258, %v213, 0
  %v269 = vsel %vm258, %v214, 0
  %v272 = vsel %vm258, %v215, 0
  %v275 = vsel %vm258, %v216, 0
  %v278 = vsel %vm258, %v217, 0
  %v281 = vsel %vm258, %v218, 0
  %v284 = vsel %vm258, %v219, 0
  %v287 = vsel %vm258, %v220, 0
  %v290 = vsel %vm258, %v221, 0
  %v293 = vsel %vm258, %v222, 0
  %v296 = vsel %vm258, %v223, 0
  %v299 = vsel %vm258, %v224, 0
  %v302 = vsel %vm258, %v225, 0
  %v305 = vsel %vm258, %v226, 0
  %v308 = vsel %vm258, %v227, 0
  %v311 = vsel %vm258, %v228, 0
  %v314 = vsel %vm258, %v229, 0
  %v317 = vsel %vm258, %v230, 0
  %v320 = vsel %vm258, %v231, 0
  %v323 = vsel %vm258, %v232, 0
  %v326 = vsel %vm258, %v233, 0
  %v329 = vsel %vm258, %v234, 0
  %v332 = vsel %vm258, %v235, 0
  %v335 = vsel %vm258, %v236, 0
  %v338 = vsel %vm258, %v237, 0
  %v341 = vsel %vm258, %v238, 0
  %v344 = vsel %vm258, %v239, 0
  %v347 = vsel %vm258, %v240, 0
  %v350 = vsel %vm258, %v241, 0
  %v353 = vsel %vm258, %v242, 0
  %vm355 = vcmask 1041408
  %v357 = vsel %vm355, %v255, 0
  %359 = vmatprep.subr.bf16.mxu0 0
  %360 = vmatpush1.bf16.msra.mxu0 0
  %361 = vmatprep.subr.bf16.mxu0 0
  %362 = vmatpush1.bf16.msra.mxu0 0
  %363 = vmatprep.subr.bf16.mxu0 0
  %364 = vmatpush1.bf16.msra.mxu0 0
  %365 = vmatprep.subr.bf16.mxu0 0
  %366 = vmatpush1.bf16.msra.mxu0 0
  %367 = vmatprep.subr.bf16.mxu0 0
  %368 = vmatpush1.bf16.msra.mxu0 0
  %369 = vmatprep.subr.bf16.mxu0 0
  %370 = vmatpush1.bf16.msra.mxu0 %v357
  %371 = vmatprep.subr.bf16.mxu0 0
  %372 = vmatpush1.bf16.msra.mxu0 %v254
  %373 = vmatprep.subr.bf16.mxu0 0
  %374 = vmatpush1.bf16.msra.mxu0 %v253
  %375 = vmatprep.subr.bf16.mxu0 0
  %376 = vmatpush2.bf16.msra.mxu0 0
  %377 = vmatprep.subr.bf16.mxu0 0
  %378 = vmatpush2.bf16.msra.mxu0 0
  %379 = vmatprep.subr.bf16.mxu0 0
  %380 = vmatpush2.bf16.msra.mxu0 0
  %381 = vmatprep.subr.bf16.mxu0 0
  %382 = vmatpush2.bf16.msra.mxu0 0
  %383 = vmatprep.subr.bf16.mxu0 0
  %384 = vmatpush2.bf16.msra.mxu0 0
  %385 = vmatprep.subr.bf16.mxu0 0
  %386 = vmatpush2.bf16.msra.mxu0 0
  %387 = vmatprep.subr.bf16.mxu0 0
  %388 = vmatpush2.bf16.msra.mxu0 0
  %389 = vmatprep.subr.bf16.mxu0 0
  %390 = vmatpush2.bf16.msra.mxu0 0
  %391 = vmatprep.mubr.bf16.mxu0 0
  %392 = vmatmul.mubr.bf16.gmra.mxu0 %v260
  %v393 = vpop.f32.mrf.mxu0
  %v394 = vadd.f32 0.0, %v393
  %v395 = vpop.f32.mrf.mxu0
  %v396 = vpop.f32.mrf.mxu0
  %v397 = vadd.f32 0.0, %v396
  %v398 = vpop.f32.mrf.mxu0
  %399 = vmatprep.mubr.bf16.mxu0 0
  %400 = vmatmul.mubr.bf16.gmra.mxu0 %v263
  %v401 = vpop.f32.mrf.mxu0
  %v402 = vadd.f32 0.0, %v401
  %v403 = vpop.f32.mrf.mxu0
  %v404 = vpop.f32.mrf.mxu0
  %v405 = vadd.f32 0.0, %v404
  %v406 = vpop.f32.mrf.mxu0
  %407 = vmatprep.mubr.bf16.mxu0 0
  %408 = vmatmul.mubr.bf16.gmra.mxu0 %v266
  %v409 = vpop.f32.mrf.mxu0
  %v410 = vadd.f32 0.0, %v409
  %v411 = vpop.f32.mrf.mxu0
  %v412 = vpop.f32.mrf.mxu0
  %v413 = vadd.f32 0.0, %v412
  %v414 = vpop.f32.mrf.mxu0
  %415 = vmatprep.mubr.bf16.mxu0 0
  %416 = vmatmul.mubr.bf16.gmra.mxu0 %v269
  %v417 = vpop.f32.mrf.mxu0
  %v418 = vadd.f32 0.0, %v417
  %v419 = vpop.f32.mrf.mxu0
  %v420 = vpop.f32.mrf.mxu0
  %v421 = vadd.f32 0.0, %v420
  %v422 = vpop.f32.mrf.mxu0
  %423 = vmatprep.mubr.bf16.mxu0 0
  %424 = vmatmul.mubr.bf16.gmra.mxu0 %v272
  %v425 = vpop.f32.mrf.mxu0
  %v426 = vadd.f32 0.0, %v425
  %v427 = vpop.f32.mrf.mxu0
  %v428 = vpop.f32.mrf.mxu0
  %v429 = vadd.f32 0.0, %v428
  %v430 = vpop.f32.mrf.mxu0
  %431 = vmatprep.mubr.bf16.mxu0 0
  %432 = vmatmul.mubr.bf16.gmra.mxu0 %v275
  %v433 = vpop.f32.mrf.mxu0
  %v434 = vadd.f32 0.0, %v433
  %v435 = vpop.f32.mrf.mxu0
  %v436 = vpop.f32.mrf.mxu0
  %v437 = vadd.f32 0.0, %v436
  %v438 = vpop.f32.mrf.mxu0
  %439 = vmatprep.mubr.bf16.mxu0 0
  %440 = vmatmul.mubr.bf16.gmra.mxu0 %v278
  %v441 = vpop.f32.mrf.mxu0
  %v442 = vadd.f32 0.0, %v441
  %v443 = vpop.f32.mrf.mxu0
  %v444 = vpop.f32.mrf.mxu0
  %v445 = vadd.f32 0.0, %v444
  %v446 = vpop.f32.mrf.mxu0
  %447 = vmatprep.mubr.bf16.mxu0 0
  %448 = vmatmul.mubr.bf16.gmra.mxu0 %v281
  %v449 = vpop.f32.mrf.mxu0
  %v450 = vadd.f32 0.0, %v449
  %v451 = vpop.f32.mrf.mxu0
  %v452 = vpop.f32.mrf.mxu0
  %v453 = vadd.f32 0.0, %v452
  %v454 = vpop.f32.mrf.mxu0
  %455 = vmatprep.mubr.bf16.mxu0 0
  %456 = vmatmul.mubr.bf16.gmra.mxu0 %v284
  %v457 = vpop.f32.mrf.mxu0
  %v458 = vadd.f32 0.0, %v457
  %v459 = vpop.f32.mrf.mxu0
  %v460 = vpop.f32.mrf.mxu0
  %v461 = vadd.f32 0.0, %v460
  %v462 = vpop.f32.mrf.mxu0
  %463 = vmatprep.mubr.bf16.mxu0 0
  %464 = vmatmul.mubr.bf16.gmra.mxu0 %v287
  %v465 = vpop.f32.mrf.mxu0
  %v466 = vadd.f32 0.0, %v465
  %v467 = vpop.f32.mrf.mxu0
  %v468 = vpop.f32.mrf.mxu0
  %v469 = vadd.f32 0.0, %v468
  %v470 = vpop.f32.mrf.mxu0
  %471 = vmatprep.mubr.bf16.mxu0 0
  %472 = vmatmul.mubr.bf16.gmra.mxu0 %v290
  %v473 = vpop.f32.mrf.mxu0
  %v474 = vadd.f32 0.0, %v473
  %v475 = vpop.f32.mrf.mxu0
  %v476 = vpop.f32.mrf.mxu0
  %v477 = vadd.f32 0.0, %v476
  %v478 = vpop.f32.mrf.mxu0
  %479 = vmatprep.mubr.bf16.mxu0 0
  %480 = vmatmul.mubr.bf16.gmra.mxu0 %v293
  %v481 = vpop.f32.mrf.mxu0
  %v482 = vadd.f32 0.0, %v481
  %v483 = vpop.f32.mrf.mxu0
  %v484 = vpop.f32.mrf.mxu0
  %v485 = vadd.f32 0.0, %v484
  %v486 = vpop.f32.mrf.mxu0
  %487 = vmatprep.mubr.bf16.mxu0 0
  %488 = vmatmul.mubr.bf16.gmra.mxu0 %v296
  %v489 = vpop.f32.mrf.mxu0
  %v490 = vadd.f32 0.0, %v489
  %v491 = vpop.f32.mrf.mxu0
  %v492 = vpop.f32.mrf.mxu0
  %v493 = vadd.f32 0.0, %v492
  %v494 = vpop.f32.mrf.mxu0
  %495 = vmatprep.mubr.bf16.mxu0 0
  %496 = vmatmul.mubr.bf16.gmra.mxu0 %v299
  %v497 = vpop.f32.mrf.mxu0
  %v498 = vadd.f32 0.0, %v497
  %v499 = vpop.f32.mrf.mxu0
  %v500 = vpop.f32.mrf.mxu0
  %v501 = vadd.f32 0.0, %v500
  %v502 = vpop.f32.mrf.mxu0
  %503 = vmatprep.mubr.bf16.mxu0 0
  %504 = vmatmul.mubr.bf16.gmra.mxu0 %v302
  %v505 = vpop.f32.mrf.mxu0
  %v506 = vadd.f32 0.0, %v505
  %v507 = vpop.f32.mrf.mxu0
  %v508 = vpop.f32.mrf.mxu0
  %v509 = vadd.f32 0.0, %v508
  %v510 = vpop.f32.mrf.mxu0
  %511 = vmatprep.mubr.bf16.mxu0 0
  %512 = vmatmul.mubr.bf16.gmra.mxu0 %v305
  %v513 = vpop.f32.mrf.mxu0
  %v514 = vadd.f32 0.0, %v513
  %v515 = vpop.f32.mrf.mxu0
  %v516 = vpop.f32.mrf.mxu0
  %v517 = vadd.f32 0.0, %v516
  %v518 = vpop.f32.mrf.mxu0
  %519 = vmatprep.mubr.bf16.mxu0 0
  %520 = vmatmul.mubr.bf16.gmra.mxu0 %v308
  %v521 = vpop.f32.mrf.mxu0
  %v522 = vadd.f32 0.0, %v521
  %v523 = vpop.f32.mrf.mxu0
  %v524 = vpop.f32.mrf.mxu0
  %v525 = vadd.f32 0.0, %v524
  %v526 = vpop.f32.mrf.mxu0
  %527 = vmatprep.mubr.bf16.mxu0 0
  %528 = vmatmul.mubr.bf16.gmra.mxu0 %v311
  %v529 = vpop.f32.mrf.mxu0
  %v530 = vadd.f32 0.0, %v529
  %v531 = vpop.f32.mrf.mxu0
  %v532 = vpop.f32.mrf.mxu0
  %v533 = vadd.f32 0.0, %v532
  %v534 = vpop.f32.mrf.mxu0
  %535 = vmatprep.mubr.bf16.mxu0 0
  %536 = vmatmul.mubr.bf16.gmra.mxu0 %v314
  %v537 = vpop.f32.mrf.mxu0
  %v538 = vadd.f32 0.0, %v537
  %v539 = vpop.f32.mrf.mxu0
  %v540 = vpop.f32.mrf.mxu0
  %v541 = vadd.f32 0.0, %v540
  %v542 = vpop.f32.mrf.mxu0
  %543 = vmatprep.mubr.bf16.mxu0 0
  %544 = vmatmul.mubr.bf16.gmra.mxu0 %v317
  %v545 = vpop.f32.mrf.mxu0
  %v546 = vadd.f32 0.0, %v545
  %v547 = vpop.f32.mrf.mxu0
  %v548 = vpop.f32.mrf.mxu0
  %v549 = vadd.f32 0.0, %v548
  %v550 = vpop.f32.mrf.mxu0
  %551 = vmatprep.mubr.bf16.mxu0 0
  %552 = vmatmul.mubr.bf16.gmra.mxu0 %v320
  %v553 = vpop.f32.mrf.mxu0
  %v554 = vadd.f32 0.0, %v553
  %v555 = vpop.f32.mrf.mxu0
  %v556 = vpop.f32.mrf.mxu0
  %v557 = vadd.f32 0.0, %v556
  %v558 = vpop.f32.mrf.mxu0
  %559 = vmatprep.mubr.bf16.mxu0 0
  %560 = vmatmul.mubr.bf16.gmra.mxu0 %v323
  %v561 = vpop.f32.mrf.mxu0
  %v562 = vadd.f32 0.0, %v561
  %v563 = vpop.f32.mrf.mxu0
  %v564 = vpop.f32.mrf.mxu0
  %v565 = vadd.f32 0.0, %v564
  %v566 = vpop.f32.mrf.mxu0
  %567 = vmatprep.mubr.bf16.mxu0 0
  %568 = vmatmul.mubr.bf16.gmra.mxu0 %v326
  %v569 = vpop.f32.mrf.mxu0
  %v570 = vadd.f32 0.0, %v569
  %v571 = vpop.f32.mrf.mxu0
  %v572 = vpop.f32.mrf.mxu0
  %v573 = vadd.f32 0.0, %v572
  %v574 = vpop.f32.mrf.mxu0
  %575 = vmatprep.mubr.bf16.mxu0 0
  %576 = vmatmul.mubr.bf16.gmra.mxu0 %v329
  %v577 = vpop.f32.mrf.mxu0
  %v578 = vadd.f32 0.0, %v577
  %v579 = vpop.f32.mrf.mxu0
  %v580 = vpop.f32.mrf.mxu0
  %v581 = vadd.f32 0.0, %v580
  %v582 = vpop.f32.mrf.mxu0
  %583 = vmatprep.mubr.bf16.mxu0 0
  %584 = vmatmul.mubr.bf16.gmra.mxu0 %v332
  %v585 = vpop.f32.mrf.mxu0
  %v586 = vadd.f32 0.0, %v585
  %v587 = vpop.f32.mrf.mxu0
  %v588 = vpop.f32.mrf.mxu0
  %v589 = vadd.f32 0.0, %v588
  %v590 = vpop.f32.mrf.mxu0
  %591 = vmatprep.mubr.bf16.mxu0 0
  %592 = vmatmul.mubr.bf16.gmra.mxu0 %v335
  %v593 = vpop.f32.mrf.mxu0
  %v594 = vadd.f32 0.0, %v593
  %v595 = vpop.f32.mrf.mxu0
  %v596 = vpop.f32.mrf.mxu0
  %v597 = vadd.f32 0.0, %v596
  %v598 = vpop.f32.mrf.mxu0
  %599 = vmatprep.mubr.bf16.mxu0 0
  %600 = vmatmul.mubr.bf16.gmra.mxu0 %v338
  %v601 = vpop.f32.mrf.mxu0
  %v602 = vadd.f32 0.0, %v601
  %v603 = vpop.f32.mrf.mxu0
  %v604 = vpop.f32.mrf.mxu0
  %v605 = vadd.f32 0.0, %v604
  %v606 = vpop.f32.mrf.mxu0
  %607 = vmatprep.mubr.bf16.mxu0 0
  %608 = vmatmul.mubr.bf16.gmra.mxu0 %v341
  %v609 = vpop.f32.mrf.mxu0
  %v610 = vadd.f32 0.0, %v609
  %v611 = vpop.f32.mrf.mxu0
  %v612 = vpop.f32.mrf.mxu0
  %v613 = vadd.f32 0.0, %v612
  %v614 = vpop.f32.mrf.mxu0
  %615 = vmatprep.mubr.bf16.mxu0 0
  %616 = vmatmul.mubr.bf16.gmra.mxu0 %v344
  %v617 = vpop.f32.mrf.mxu0
  %v618 = vadd.f32 0.0, %v617
  %v619 = vpop.f32.mrf.mxu0
  %v620 = vpop.f32.mrf.mxu0
  %v621 = vadd.f32 0.0, %v620
  %v622 = vpop.f32.mrf.mxu0
  %623 = vmatprep.mubr.bf16.mxu0 0
  %624 = vmatmul.mubr.bf16.gmra.mxu0 %v347
  %v625 = vpop.f32.mrf.mxu0
  %v626 = vadd.f32 0.0, %v625
  %v627 = vpop.f32.mrf.mxu0
  %v628 = vpop.f32.mrf.mxu0
  %v629 = vadd.f32 0.0, %v628
  %v630 = vpop.f32.mrf.mxu0
  %631 = vmatprep.mubr.bf16.mxu0 0
  %632 = vmatmul.mubr.bf16.gmra.mxu0 %v350
  %v633 = vpop.f32.mrf.mxu0
  %v634 = vadd.f32 0.0, %v633
  %v635 = vpop.f32.mrf.mxu0
  %v636 = vpop.f32.mrf.mxu0
  %v637 = vadd.f32 0.0, %v636
  %v638 = vpop.f32.mrf.mxu0
  %639 = vmatprep.mubr.bf16.mxu0 0
  %640 = vmatmul.mubr.bf16.gmra.mxu0 %v353
  %v641 = vpop.f32.mrf.mxu0
  %v642 = vadd.f32 0.0, %v641
  %v643 = vpop.f32.mrf.mxu0
  %v644 = vpop.f32.mrf.mxu0
  %v645 = vadd.f32 0.0, %v644
  %v646 = vpop.f32.mrf.mxu0
  %647 = vdwg.mxu0
  %v648 = vpack.c.bf16 %v397, %v394
  %v649 = vpack.c.bf16 %v405, %v402
  %v650 = vpack.c.bf16 %v413, %v410
  %v651 = vpack.c.bf16 %v421, %v418
  %v652 = vpack.c.bf16 %v429, %v426
  %v653 = vpack.c.bf16 %v437, %v434
  %v654 = vpack.c.bf16 %v445, %v442
  %v655 = vpack.c.bf16 %v453, %v450
  %v656 = vpack.c.bf16 %v461, %v458
  %v657 = vpack.c.bf16 %v469, %v466
  %v658 = vpack.c.bf16 %v477, %v474
  %v659 = vpack.c.bf16 %v485, %v482
  %v660 = vpack.c.bf16 %v493, %v490
  %v661 = vpack.c.bf16 %v501, %v498
  %v662 = vpack.c.bf16 %v509, %v506
  %v663 = vpack.c.bf16 %v517, %v514
  %v664 = vpack.c.bf16 %v525, %v522
  %v665 = vpack.c.bf16 %v533, %v530
  %v666 = vpack.c.bf16 %v541, %v538
  %v667 = vpack.c.bf16 %v549, %v546
  %v668 = vpack.c.bf16 %v557, %v554
  %v669 = vpack.c.bf16 %v565, %v562
  %v670 = vpack.c.bf16 %v573, %v570
  %v671 = vpack.c.bf16 %v581, %v578
  %v672 = vpack.c.bf16 %v589, %v586
  %v673 = vpack.c.bf16 %v597, %v594
  %v674 = vpack.c.bf16 %v605, %v602
  %v675 = vpack.c.bf16 %v613, %v610
  %v676 = vpack.c.bf16 %v621, %v618
  %v677 = vpack.c.bf16 %v629, %v626
  %v678 = vpack.c.bf16 %v637, %v634
  %v679 = vpack.c.bf16 %v645, %v642
  %v712 = vunpack.c.l.b16 %v648
  %v713 = vunpack.c.h.b16 %v648
  %v714 = vunpack.c.l.b16 %v649
  %v715 = vunpack.c.h.b16 %v649
  %v716 = vunpack.c.l.b16 %v650
  %v717 = vunpack.c.h.b16 %v650
  %v718 = vunpack.c.l.b16 %v651
  %v719 = vunpack.c.h.b16 %v651
  %v720 = vunpack.c.l.b16 %v652
  %v721 = vunpack.c.h.b16 %v652
  %v722 = vunpack.c.l.b16 %v653
  %v723 = vunpack.c.h.b16 %v653
  %v724 = vunpack.c.l.b16 %v654
  %v725 = vunpack.c.h.b16 %v654
  %v726 = vunpack.c.l.b16 %v655
  %v727 = vunpack.c.h.b16 %v655
  %v728 = vunpack.c.l.b16 %v656
  %v729 = vunpack.c.h.b16 %v656
  %v730 = vunpack.c.l.b16 %v657
  %v731 = vunpack.c.h.b16 %v657
  %v732 = vunpack.c.l.b16 %v658
  %v733 = vunpack.c.h.b16 %v658
  %v734 = vunpack.c.l.b16 %v659
  %v735 = vunpack.c.h.b16 %v659
  %v736 = vunpack.c.l.b16 %v660
  %v737 = vunpack.c.h.b16 %v660
  %v738 = vunpack.c.l.b16 %v661
  %v739 = vunpack.c.h.b16 %v661
  %v740 = vunpack.c.l.b16 %v662
  %v741 = vunpack.c.h.b16 %v662
  %v742 = vunpack.c.l.b16 %v663
  %v743 = vunpack.c.h.b16 %v663
  %v744 = vunpack.c.l.b16 %v664
  %v745 = vunpack.c.h.b16 %v664
  %v746 = vunpack.c.l.b16 %v665
  %v747 = vunpack.c.h.b16 %v665
  %v748 = vunpack.c.l.b16 %v666
  %v749 = vunpack.c.h.b16 %v666
  %v750 = vunpack.c.l.b16 %v667
  %v751 = vunpack.c.h.b16 %v667
  %v752 = vunpack.c.l.b16 %v668
  %v753 = vunpack.c.h.b16 %v668
  %v754 = vunpack.c.l.b16 %v669
  %v755 = vunpack.c.h.b16 %v669
  %v756 = vunpack.c.l.b16 %v670
  %v757 = vunpack.c.h.b16 %v670
  %v758 = vunpack.c.l.b16 %v671
  %v759 = vunpack.c.h.b16 %v671
  %v760 = vunpack.c.l.b16 %v672
  %v761 = vunpack.c.h.b16 %v672
  %v762 = vunpack.c.l.b16 %v673
  %v763 = vunpack.c.h.b16 %v673
  %v764 = vunpack.c.l.b16 %v674
  %v765 = vunpack.c.h.b16 %v674
  %v766 = vunpack.c.l.b16 %v675
  %v767 = vunpack.c.h.b16 %v675
  %v768 = vunpack.c.l.b16 %v676
  %v769 = vunpack.c.h.b16 %v676
  %v770 = vunpack.c.l.b16 %v677
  %v771 = vunpack.c.h.b16 %v677
  %v772 = vunpack.c.l.b16 %v678
  %v773 = vunpack.c.h.b16 %v678
  %v774 = vunpack.c.l.b16 %v679
  %v775 = vunpack.c.h.b16 %v679
  %v776 = vpack.c.b16 %v712, %v712
  %v777 = vpack.c.b16 %v713, %v713
  %v778 = vpack.c.b16 %v714, %v714
  %v779 = vpack.c.b16 %v715, %v715
  %v780 = vpack.c.b16 %v716, %v716
  %v781 = vpack.c.b16 %v717, %v717
  %v782 = vpack.c.b16 %v718, %v718
  %v783 = vpack.c.b16 %v719, %v719
  %v784 = vpack.c.b16 %v720, %v720
  %v785 = vpack.c.b16 %v721, %v721
  %v786 = vpack.c.b16 %v722, %v722
  %v787 = vpack.c.b16 %v723, %v723
  %v788 = vpack.c.b16 %v724, %v724
  %v789 = vpack.c.b16 %v725, %v725
  %v790 = vpack.c.b16 %v726, %v726
  %v791 = vpack.c.b16 %v727, %v727
  %v792 = vpack.c.b16 %v728, %v728
  %v793 = vpack.c.b16 %v729, %v729
  %v794 = vpack.c.b16 %v730, %v730
  %v795 = vpack.c.b16 %v731, %v731
  %v796 = vpack.c.b16 %v732, %v732
  %v797 = vpack.c.b16 %v733, %v733
  %v798 = vpack.c.b16 %v734, %v734
  %v799 = vpack.c.b16 %v735, %v735
  %v800 = vpack.c.b16 %v736, %v736
  %v801 = vpack.c.b16 %v737, %v737
  %v802 = vpack.c.b16 %v738, %v738
  %v803 = vpack.c.b16 %v739, %v739
  %v804 = vpack.c.b16 %v740, %v740
  %v805 = vpack.c.b16 %v741, %v741
  %v806 = vpack.c.b16 %v742, %v742
  %v807 = vpack.c.b16 %v743, %v743
  %v808 = vpack.c.b16 %v744, %v744
  %v809 = vpack.c.b16 %v745, %v745
  %v810 = vpack.c.b16 %v746, %v746
  %v811 = vpack.c.b16 %v747, %v747
  %v812 = vpack.c.b16 %v748, %v748
  %v813 = vpack.c.b16 %v749, %v749
  %v814 = vpack.c.b16 %v750, %v750
  %v815 = vpack.c.b16 %v751, %v751
  %v816 = vpack.c.b16 %v752, %v752
  %v817 = vpack.c.b16 %v753, %v753
  %v818 = vpack.c.b16 %v754, %v754
  %v819 = vpack.c.b16 %v755, %v755
  %v820 = vpack.c.b16 %v756, %v756
  %v821 = vpack.c.b16 %v757, %v757
  %v822 = vpack.c.b16 %v758, %v758
  %v823 = vpack.c.b16 %v759, %v759
  %v824 = vpack.c.b16 %v760, %v760
  %v825 = vpack.c.b16 %v761, %v761
  %v826 = vpack.c.b16 %v762, %v762
  %v827 = vpack.c.b16 %v763, %v763
  %v828 = vpack.c.b16 %v764, %v764
  %v829 = vpack.c.b16 %v765, %v765
  %v830 = vpack.c.b16 %v766, %v766
  %v831 = vpack.c.b16 %v767, %v767
  %v832 = vpack.c.b16 %v768, %v768
  %v833 = vpack.c.b16 %v769, %v769
  %v834 = vpack.c.b16 %v770, %v770
  %v835 = vpack.c.b16 %v771, %v771
  %v836 = vpack.c.b16 %v772, %v772
  %v837 = vpack.c.b16 %v773, %v773
  %v838 = vpack.c.b16 %v774, %v774
  %v839 = vpack.c.b16 %v775, %v775
  %904 = vst [vmem:[%s2] sm:$0xf] %v776
  %905 = vst [vmem:[%s2 + $0x4] sm:$0xf] %v777
  %906 = vst [vmem:[%s2 + $0x8] sm:$0xf] %v778
  %907 = vst [vmem:[%s2 + $0xc] sm:$0xf] %v779
  %908 = vst [vmem:[%s2 + $0x10] sm:$0xf] %v780
  %909 = vst [vmem:[%s2 + $0x14] sm:$0xf] %v781
  %910 = vst [vmem:[%s2 + $0x18] sm:$0xf] %v782
  %911 = vst [vmem:[%s2 + $0x1c] sm:$0xf] %v783
  %912 = vst [vmem:[%s2 + $0x20] sm:$0xf] %v784
  %913 = vst [vmem:[%s2 + $0x24] sm:$0xf] %v785
  %914 = vst [vmem:[%s2 + $0x28] sm:$0xf] %v786
  %915 = vst [vmem:[%s2 + $0x2c] sm:$0xf] %v787
  %916 = vst [vmem:[%s2 + $0x30] sm:$0xf] %v788
  %917 = vst [vmem:[%s2 + $0x34] sm:$0xf] %v789
  %918 = vst [vmem:[%s2 + $0x38] sm:$0xf] %v790
  %919 = vst [vmem:[%s2 + $0x3c] sm:$0xf] %v791
  %920 = vst [vmem:[%s2 + $0x40] sm:$0xf] %v792
  %921 = vst [vmem:[%s2 + $0x44] sm:$0xf] %v793
  %922 = vst [vmem:[%s2 + $0x48] sm:$0xf] %v794
  %923 = vst [vmem:[%s2 + $0x4c] sm:$0xf] %v795
  %924 = vst [vmem:[%s2 + $0x50] sm:$0xf] %v796
  %925 = vst [vmem:[%s2 + $0x54] sm:$0xf] %v797
  %926 = vst [vmem:[%s2 + $0x58] sm:$0xf] %v798
  %927 = vst [vmem:[%s2 + $0x5c] sm:$0xf] %v799
  %928 = vst [vmem:[%s2 + $0x60] sm:$0xf] %v800
  %929 = vst [vmem:[%s2 + $0x64] sm:$0xf] %v801
  %930 = vst [vmem:[%s2 + $0x68] sm:$0xf] %v802
  %931 = vst [vmem:[%s2 + $0x6c] sm:$0xf] %v803
  %932 = vst [vmem:[%s2 + $0x70] sm:$0xf] %v804
  %933 = vst [vmem:[%s2 + $0x74] sm:$0xf] %v805
  %934 = vst [vmem:[%s2 + $0x78] sm:$0xf] %v806
  %935 = vst [vmem:[%s2 + $0x7c] sm:$0xf] %v807
  %936 = vst [vmem:[%s2 + $0x80] sm:$0xf] %v808
  %937 = vst [vmem:[%s2 + $0x84] sm:$0xf] %v809
  %938 = vst [vmem:[%s2 + $0x88] sm:$0xf] %v810
  %939 = vst [vmem:[%s2 + $0x8c] sm:$0xf] %v811
  %940 = vst [vmem:[%s2 + $0x90] sm:$0xf] %v812
  %941 = vst [vmem:[%s2 + $0x94] sm:$0xf] %v813
  %942 = vst [vmem:[%s2 + $0x98] sm:$0xf] %v814
  %943 = vst [vmem:[%s2 + $0x9c] sm:$0xf] %v815
  %944 = vst [vmem:[%s2 + $0xa0] sm:$0xf] %v816
  %945 = vst [vmem:[%s2 + $0xa4] sm:$0xf] %v817
  %946 = vst [vmem:[%s2 + $0xa8] sm:$0xf] %v818
  %947 = vst [vmem:[%s2 + $0xac] sm:$0xf] %v819
  %948 = vst [vmem:[%s2 + $0xb0] sm:$0xf] %v820
  %949 = vst [vmem:[%s2 + $0xb4] sm:$0xf] %v821
  %950 = vst [vmem:[%s2 + $0xb8] sm:$0xf] %v822
  %951 = vst [vmem:[%s2 + $0xbc] sm:$0xf] %v823
  %952 = vst [vmem:[%s2 + $0xc0] sm:$0xf] %v824
  %953 = vst [vmem:[%s2 + $0xc4] sm:$0xf] %v825
  %954 = vst [vmem:[%s2 + $0xc8] sm:$0xf] %v826
  %955 = vst [vmem:[%s2 + $0xcc] sm:$0xf] %v827
  %956 = vst [vmem:[%s2 + $0xd0] sm:$0xf] %v828
  %957 = vst [vmem:[%s2 + $0xd4] sm:$0xf] %v829
  %958 = vst [vmem:[%s2 + $0xd8] sm:$0xf] %v830
  %959 = vst [vmem:[%s2 + $0xdc] sm:$0xf] %v831
  %960 = vst [vmem:[%s2 + $0xe0] sm:$0xf] %v832
  %961 = vst [vmem:[%s2 + $0xe4] sm:$0xf] %v833
  %962 = vst [vmem:[%s2 + $0xe8] sm:$0xf] %v834
  %963 = vst [vmem:[%s2 + $0xec] sm:$0xf] %v835
  %964 = vst [vmem:[%s2 + $0xf0] sm:$0xf] %v836
  %965 = vst [vmem:[%s2 + $0xf4] sm:$0xf] %v837
  %966 = vst [vmem:[%s2 + $0xf8] sm:$0xf] %v838
  %967 = vst [vmem:[%s2 + $0xfc] sm:$0xf] %v839
  %v968 = vadd.f32 %v394, %v397
  %v969 = vadd.f32 %v968, %v402
  %v970 = vadd.f32 %v969, %v405
  %v971 = vadd.f32 %v970, %v410
  %v972 = vadd.f32 %v971, %v413
  %v973 = vadd.f32 %v972, %v418
  %v974 = vadd.f32 %v973, %v421
  %v975 = vadd.f32 %v974, %v426
  %v976 = vadd.f32 %v975, %v429
  %v977 = vadd.f32 %v976, %v434
  %v978 = vadd.f32 %v977, %v437
  %v979 = vadd.f32 %v978, %v442
  %v980 = vadd.f32 %v979, %v445
  %v981 = vadd.f32 %v980, %v450
  %v982 = vadd.f32 %v981, %v453
  %v983 = vadd.f32 %v982, %v458
  %v984 = vadd.f32 %v983, %v461
  %v985 = vadd.f32 %v984, %v466
  %v986 = vadd.f32 %v985, %v469
  %v987 = vadd.f32 %v986, %v474
  %v988 = vadd.f32 %v987, %v477
  %v989 = vadd.f32 %v988, %v482
  %v990 = vadd.f32 %v989, %v485
  %v991 = vadd.f32 %v990, %v490
  %v992 = vadd.f32 %v991, %v493
  %v993 = vadd.f32 %v992, %v498
  %v994 = vadd.f32 %v993, %v501
  %v995 = vadd.f32 %v994, %v506
  %v996 = vadd.f32 %v995, %v509
  %v997 = vadd.f32 %v996, %v514
  %v998 = vadd.f32 %v997, %v517
  %v999 = vadd.f32 %v998, %v522
  %v1000 = vadd.f32 %v999, %v525
  %v1001 = vadd.f32 %v1000, %v530
  %v1002 = vadd.f32 %v1001, %v533
  %v1003 = vadd.f32 %v1002, %v538
  %v1004 = vadd.f32 %v1003, %v541
  %v1005 = vadd.f32 %v1004, %v546
  %v1006 = vadd.f32 %v1005, %v549
  %v1007 = vadd.f32 %v1006, %v554
  %v1008 = vadd.f32 %v1007, %v557
  %v1009 = vadd.f32 %v1008, %v562
  %v1010 = vadd.f32 %v1009, %v565
  %v1011 = vadd.f32 %v1010, %v570
  %v1012 = vadd.f32 %v1011, %v573
  %v1013 = vadd.f32 %v1012, %v578
  %v1014 = vadd.f32 %v1013, %v581
  %v1015 = vadd.f32 %v1014, %v586
  %v1016 = vadd.f32 %v1015, %v589
  %v1017 = vadd.f32 %v1016, %v594
  %v1018 = vadd.f32 %v1017, %v597
  %v1019 = vadd.f32 %v1018, %v602
  %v1020 = vadd.f32 %v1019, %v605
  %v1021 = vadd.f32 %v1020, %v610
  %v1022 = vadd.f32 %v1021, %v613
  %v1023 = vadd.f32 %v1022, %v618
  %v1024 = vadd.f32 %v1023, %v621
  %v1025 = vadd.f32 %v1024, %v626
  %v1026 = vadd.f32 %v1025, %v629
  %v1027 = vadd.f32 %v1026, %v634
  %v1028 = vadd.f32 %v1027, %v637
  %v1029 = vadd.f32 %v1028, %v642
  %v1030 = vadd.f32 %v1029, %v645
  %v1031 = vrot.slane %v1030, 4
  %v1032 = vadd.f32 %v1030, %v1031
  %v1033 = vrot.slane %v1032, 2
  %v1034 = vadd.f32 %v1032, %v1033
  %v1035 = vrot.slane %v1034, 1
  %v1036 = vadd.f32 %v1034, %v1035
  %v1037 = vmul.f32 %v394, %v394
  %v1038 = vmul.f32 %v397, %v397
  %v1039 = vmul.f32 %v402, %v402
  %v1040 = vmul.f32 %v405, %v405
  %v1041 = vmul.f32 %v410, %v410
  %v1042 = vmul.f32 %v413, %v413
  %v1043 = vmul.f32 %v418, %v418
  %v1044 = vmul.f32 %v421, %v421
  %v1045 = vmul.f32 %v426, %v426
  %v1046 = vmul.f32 %v429, %v429
  %v1047 = vmul.f32 %v434, %v434
  %v1048 = vmul.f32 %v437, %v437
  %v1049 = vmul.f32 %v442, %v442
  %v1050 = vmul.f32 %v445, %v445
  %v1051 = vmul.f32 %v450, %v450
  %v1052 = vmul.f32 %v453, %v453
  %v1053 = vmul.f32 %v458, %v458
  %v1054 = vmul.f32 %v461, %v461
  %v1055 = vmul.f32 %v466, %v466
  %v1056 = vmul.f32 %v469, %v469
  %v1057 = vmul.f32 %v474, %v474
  %v1058 = vmul.f32 %v477, %v477
  %v1059 = vmul.f32 %v482, %v482
  %v1060 = vmul.f32 %v485, %v485
  %v1061 = vmul.f32 %v490, %v490
  %v1062 = vmul.f32 %v493, %v493
  %v1063 = vmul.f32 %v498, %v498
  %v1064 = vmul.f32 %v501, %v501
  %v1065 = vmul.f32 %v506, %v506
  %v1066 = vmul.f32 %v509, %v509
  %v1067 = vmul.f32 %v514, %v514
  %v1068 = vmul.f32 %v517, %v517
  %v1069 = vmul.f32 %v522, %v522
  %v1070 = vmul.f32 %v525, %v525
  %v1071 = vmul.f32 %v530, %v530
  %v1072 = vmul.f32 %v533, %v533
  %v1073 = vmul.f32 %v538, %v538
  %v1074 = vmul.f32 %v541, %v541
  %v1075 = vmul.f32 %v546, %v546
  %v1076 = vmul.f32 %v549, %v549
  %v1077 = vmul.f32 %v554, %v554
  %v1078 = vmul.f32 %v557, %v557
  %v1079 = vmul.f32 %v562, %v562
  %v1080 = vmul.f32 %v565, %v565
  %v1081 = vmul.f32 %v570, %v570
  %v1082 = vmul.f32 %v573, %v573
  %v1083 = vmul.f32 %v578, %v578
  %v1084 = vmul.f32 %v581, %v581
  %v1085 = vmul.f32 %v586, %v586
  %v1086 = vmul.f32 %v589, %v589
  %v1087 = vmul.f32 %v594, %v594
  %v1088 = vmul.f32 %v597, %v597
  %v1089 = vmul.f32 %v602, %v602
  %v1090 = vmul.f32 %v605, %v605
  %v1091 = vmul.f32 %v610, %v610
  %v1092 = vmul.f32 %v613, %v613
  %v1093 = vmul.f32 %v618, %v618
  %v1094 = vmul.f32 %v621, %v621
  %v1095 = vmul.f32 %v626, %v626
  %v1096 = vmul.f32 %v629, %v629
  %v1097 = vmul.f32 %v634, %v634
  %v1098 = vmul.f32 %v637, %v637
  %v1099 = vmul.f32 %v642, %v642
  %v1100 = vmul.f32 %v645, %v645
  %v1101 = vadd.f32 %v1037, %v1038
  %v1102 = vadd.f32 %v1101, %v1039
  %v1103 = vadd.f32 %v1102, %v1040
  %v1104 = vadd.f32 %v1103, %v1041
  %v1105 = vadd.f32 %v1104, %v1042
  %v1106 = vadd.f32 %v1105, %v1043
  %v1107 = vadd.f32 %v1106, %v1044
  %v1108 = vadd.f32 %v1107, %v1045
  %v1109 = vadd.f32 %v1108, %v1046
  %v1110 = vadd.f32 %v1109, %v1047
  %v1111 = vadd.f32 %v1110, %v1048
  %v1112 = vadd.f32 %v1111, %v1049
  %v1113 = vadd.f32 %v1112, %v1050
  %v1114 = vadd.f32 %v1113, %v1051
  %v1115 = vadd.f32 %v1114, %v1052
  %v1116 = vadd.f32 %v1115, %v1053
  %v1117 = vadd.f32 %v1116, %v1054
  %v1118 = vadd.f32 %v1117, %v1055
  %v1119 = vadd.f32 %v1118, %v1056
  %v1120 = vadd.f32 %v1119, %v1057
  %v1121 = vadd.f32 %v1120, %v1058
  %v1122 = vadd.f32 %v1121, %v1059
  %v1123 = vadd.f32 %v1122, %v1060
  %v1124 = vadd.f32 %v1123, %v1061
  %v1125 = vadd.f32 %v1124, %v1062
  %v1126 = vadd.f32 %v1125, %v1063
  %v1127 = vadd.f32 %v1126, %v1064
  %v1128 = vadd.f32 %v1127, %v1065
  %v1129 = vadd.f32 %v1128, %v1066
  %v1130 = vadd.f32 %v1129, %v1067
  %v1131 = vadd.f32 %v1130, %v1068
  %v1132 = vadd.f32 %v1131, %v1069
  %v1133 = vadd.f32 %v1132, %v1070
  %v1134 = vadd.f32 %v1133, %v1071
  %v1135 = vadd.f32 %v1134, %v1072
  %v1136 = vadd.f32 %v1135, %v1073
  %v1137 = vadd.f32 %v1136, %v1074
  %v1138 = vadd.f32 %v1137, %v1075
  %v1139 = vadd.f32 %v1138, %v1076
  %v1140 = vadd.f32 %v1139, %v1077
  %v1141 = vadd.f32 %v1140, %v1078
  %v1142 = vadd.f32 %v1141, %v1079
  %v1143 = vadd.f32 %v1142, %v1080
  %v1144 = vadd.f32 %v1143, %v1081
  %v1145 = vadd.f32 %v1144, %v1082
  %v1146 = vadd.f32 %v1145, %v1083
  %v1147 = vadd.f32 %v1146, %v1084
  %v1148 = vadd.f32 %v1147, %v1085
  %v1149 = vadd.f32 %v1148, %v1086
  %v1150 = vadd.f32 %v1149, %v1087
  %v1151 = vadd.f32 %v1150, %v1088
  %v1152 = vadd.f32 %v1151, %v1089
  %v1153 = vadd.f32 %v1152, %v1090
  %v1154 = vadd.f32 %v1153, %v1091
  %v1155 = vadd.f32 %v1154, %v1092
  %v1156 = vadd.f32 %v1155, %v1093
  %v1157 = vadd.f32 %v1156, %v1094
  %v1158 = vadd.f32 %v1157, %v1095
  %v1159 = vadd.f32 %v1158, %v1096
  %v1160 = vadd.f32 %v1159, %v1097
  %v1161 = vadd.f32 %v1160, %v1098
  %v1162 = vadd.f32 %v1161, %v1099
  %v1163 = vadd.f32 %v1162, %v1100
  %v1164 = vrot.slane %v1163, 4
  %v1165 = vadd.f32 %v1163, %v1164
  %v1166 = vrot.slane %v1165, 2
  %v1167 = vadd.f32 %v1165, %v1166
  %v1168 = vrot.slane %v1167, 1
  %v1169 = vadd.f32 %v1167, %v1168
  %vm1170 = vcmask 1040384
  %v1171 = vsel %vm1170, %v1036, %v1169
  %v1172 = vsel %vm355, %v1171, 0.0
  %1173 = vst [vmem:[%s3] sm:$0xff] %v1172
  // Predicated region
  $region10: #{bn_conv2d.2} parent=0 // pred_check
    _
  $region11: #{bn_conv2d.2} parent=0 // pred_check_branch
    %1175 = sbr.rel (0) target = $region13
  $region12: #{bn_conv2d.2} parent=0 // pred_region
    _
  $region13: #{bn_conv2d.2} parent=0 // pred_fallthru
    _
  // Predicated region
  $region14: #{bn_conv2d.2} parent=0 // pred_check
    _
  $region15: #{bn_conv2d.2} parent=0 // pred_check_branch
    %1177 = sbr.rel (0) target = $region17
  $region16: #{bn_conv2d.2} parent=0 // pred_region
    _
  $region17: #{bn_conv2d.2} parent=0 // pred_fallthru
    _
  // Predicated region
  $region18: #{bn_conv2d.2} parent=0 // pred_check
    _
  $region19: #{bn_conv2d.2} parent=0 // pred_check_branch
    %1179 = sbr.rel (0) target = $region21
  $region20: #{bn_conv2d.2} parent=0 // pred_region
    _
  $region21: #{bn_conv2d.2} parent=0 // pred_fallthru
    _
  // Predicated region
  $region22: #{bn_conv2d.2} parent=0 // pred_check
    _
  $region23: #{bn_conv2d.2} parent=0 // pred_check_branch
    %1181 = sbr.rel (0) target = $region25
  $region24: #{bn_conv2d.2} parent=0 // pred_region
    _
  $region25: #{bn_conv2d.2} parent=0 // pred_fallthru
    _

</llo_original>
